<compile_context>
chip_gen: v5e
topology: v5e:2x2
jax: 0.10.0
libtpu: 0.0.40
codegen_flags: <defaults>
</compile_context>

<pallas_src>
import functools
import math

import jax
import jax.numpy as jnp
from jax.experimental import pallas as pl
from jax.experimental.pallas import tpu as pltpu


# ----------------------------------------------------------------------------
# Pallas kernels
# ----------------------------------------------------------------------------

def _linear_kernel(x_ref, w_ref, b_ref, o_ref):
    """o = x @ w + b.  x:[M,K], w:[K,N] (bf16 or f32), b:[1,N] f32."""
    x = x_ref[...]
    w = w_ref[...]
    y = jnp.dot(x.astype(w.dtype), w, preferred_element_type=jnp.float32) + b_ref[...]
    o_ref[...] = y.astype(o_ref.dtype)


def linear(x, w, b):
    """x: [..., K] @ w: [K, N] + b."""
    lead = x.shape[:-1]
    K = x.shape[-1]
    N = w.shape[-1]
    x2 = x.reshape(-1, K)
    M = x2.shape[0]
    out = pl.pallas_call(
        _linear_kernel,
        out_shape=jax.ShapeDtypeStruct((M, N), jnp.float32),
        grid=(1,),
        in_specs=[
            pl.BlockSpec((M, K), lambda i: (0, 0)),
            pl.BlockSpec((K, N), lambda i: (0, 0)),
            pl.BlockSpec((1, N), lambda i: (0, 0)),
        ],
        out_specs=pl.BlockSpec((M, N), lambda i: (0, 0)),
    )(x2, w, b.reshape(1, N))
    return out.reshape(*lead, N)


def _ln_f32(x, g, b, eps):
    """LayerNorm over last dim in f32.  x:[M,D], g/b:[1,D]."""
    mu = jnp.mean(x, axis=-1, keepdims=True)
    var = jnp.mean((x - mu) * (x - mu), axis=-1, keepdims=True)
    return (x - mu) * jax.lax.rsqrt(var + eps) * g + b


def _layernorm_kernel(x_ref, g_ref, b_ref, o_ref, *, eps):
    o_ref[...] = _ln_f32(x_ref[...], g_ref[...], b_ref[...], eps).astype(o_ref.dtype)


def layernorm(x, gamma, beta, eps=1e-12):
    lead = x.shape[:-1]
    D = x.shape[-1]
    x2 = x.reshape(-1, D)
    M = x2.shape[0]
    out = pl.pallas_call(
        functools.partial(_layernorm_kernel, eps=eps),
        out_shape=jax.ShapeDtypeStruct((M, D), jnp.float32),
        grid=(1,),
        in_specs=[
            pl.BlockSpec((M, D), lambda i: (0, 0)),
            pl.BlockSpec((1, D), lambda i: (0, 0)),
            pl.BlockSpec((1, D), lambda i: (0, 0)),
        ],
        out_specs=pl.BlockSpec((M, D), lambda i: (0, 0)),
    )(x2, gamma.reshape(1, D), beta.reshape(1, D))
    return out.reshape(*lead, D)


def _vit_block_kernel(h_ref, ln1g_ref, ln1b_ref, wqkv_ref, bqkv_ref,
                      wo_ref, bo_ref, ln2g_ref, ln2b_ref,
                      w1_ref, b1_ref, w2_ref, b2_ref,
                      o_ref, p_ref, *, heads, scale, eps):
    """One full transformer encoder block for one batch element (grid over B)."""
    x = h_ref[0]                                       # [S, D] f32
    S, D = x.shape
    dh = D // heads

    # --- LayerNorm 1 (f32) ---
    ln1 = _ln_f32(x, ln1g_ref[...], ln1b_ref[...], eps)

    # --- fused QKV projection (bf16 operands, f32 accumulate) ---
    qkv = jnp.dot(ln1.astype(wqkv_ref.dtype), wqkv_ref[...],
                  preferred_element_type=jnp.float32) + bqkv_ref[...]      # [S, 3D]
    q = (qkv[:, 0:D] * scale).astype(wqkv_ref.dtype)   # fold 1/sqrt(dh) into q
    k = qkv[:, D:2 * D].astype(wqkv_ref.dtype)
    v = qkv[:, 2 * D:3 * D].astype(wqkv_ref.dtype)

    # --- multi-head attention (all heads in this single invocation) ---
    ctx_heads = []
    for hh in range(heads):
        sl = slice(hh * dh, (hh + 1) * dh)
        s = jax.lax.dot_general(q[:, sl], k[:, sl], (((1,), (1,)), ((), ())),
                                preferred_element_type=jnp.float32)        # [S, S]
        s = s - jnp.max(s, axis=-1, keepdims=True)
        e = jnp.exp(s)
        p = e * pl.reciprocal(jnp.sum(e, axis=-1, keepdims=True), approx=True)
        p_ref[0, hh] = p.astype(p_ref.dtype)
        ctx_heads.append(jnp.dot(p.astype(v.dtype), v[:, sl],
                                 preferred_element_type=jnp.float32))      # [S, dh]
    ctx = jnp.concatenate(ctx_heads, axis=-1)                              # [S, D] f32

    # --- output projection + residual ---
    attn_out = jnp.dot(ctx.astype(wo_ref.dtype), wo_ref[...],
                       preferred_element_type=jnp.float32) + bo_ref[...]
    h1 = x + attn_out

    # --- LayerNorm 2 + MLP (GELU) + residual ---
    ln2 = _ln_f32(h1, ln2g_ref[...], ln2b_ref[...], eps)
    u = jnp.dot(ln2.astype(w1_ref.dtype), w1_ref[...],
                preferred_element_type=jnp.float32) + b1_ref[...]
    # tanh-approx GELU in f32 (HF ViT uses exact erf GELU; approximation is close)
    u = 0.5 * u * (1.0 + jnp.tanh(0.7978845608028654 * (u + 0.044715 * u * u * u)))
    d = jnp.dot(u.astype(w2_ref.dtype), w2_ref[...],
                preferred_element_type=jnp.float32) + b2_ref[...]

    o_ref[0] = (h1 + d).astype(o_ref.dtype)


def vit_block(h, lp, *, heads, eps=1e-12):
    """h: [B, S, D] -> (new h [B,S,D], attn probs [B,H,S,S]) via ONE pallas_call."""
    B, S, D = h.shape
    Dm = lp["w1"].shape[1]
    Hh = heads

    def full(shape):
        return pl.BlockSpec(shape, lambda b: (0,) * len(shape))

    kernel = functools.partial(_vit_block_kernel, heads=heads,
                               scale=1.0 / math.sqrt(D // heads), eps=eps)
    h_out, probs = pl.pallas_call(
        kernel,
        out_shape=(
            jax.ShapeDtypeStruct((B, S, D), jnp.float32),
            jax.ShapeDtypeStruct((B, Hh, S, S), jnp.float32),
        ),
        grid=(B,),
        in_specs=[
            pl.BlockSpec((1, S, D), lambda b: (b, 0, 0)),
            full((1, D)), full((1, D)),            # ln1 gamma/beta
            full((D, 3 * D)), full((1, 3 * D)),    # fused qkv
            full((D, D)), full((1, D)),            # out proj
            full((1, D)), full((1, D)),            # ln2 gamma/beta
            full((D, Dm)), full((1, Dm)),          # mlp up
            full((Dm, D)), full((1, D)),           # mlp down
        ],
        out_specs=(
            pl.BlockSpec((1, S, D), lambda b: (b, 0, 0)),
            pl.BlockSpec((1, Hh, S, S), lambda b: (b, 0, 0, 0)),
        ),
        compiler_params=pltpu.CompilerParams(dimension_semantics=("parallel",)),
    )(h, lp["ln1_g"], lp["ln1_b"], lp["wqkv"], lp["bqkv"],
      lp["wo"], lp["bo"], lp["ln2_g"], lp["ln2_b"],
      lp["w1"], lp["b1"], lp["w2"], lp["b2"])
    return h_out, probs


# ----------------------------------------------------------------------------
# Model (glue in plain JAX, compute in the kernels above)
# ----------------------------------------------------------------------------

def init_params(key, *, channels, patch, hidden, heads, mlp_dim, num_layers,
                num_labels, in_dim, hid_dim, num_patches):
    # TODO(synk): pretrained google/vit-base-patch16-224-in21k weights cannot be
    # loaded here (no network/files); structure-matched synthetic params instead.
    def nrm(k, shape, scale=0.02):
        return (scale * jax.random.normal(k, shape)).astype(jnp.float32)

    keys = iter(jax.random.split(key, 8 + 4 * num_layers))
    p = {
        "patch_w": nrm(next(keys), (channels * patch * patch, hidden)).astype(jnp.bfloat16),
        "patch_b": jnp.zeros((1, hidden), jnp.float32),
        "cls_token": nrm(next(keys), (1, 1, hidden)),
        "pos_emb": nrm(next(keys), (1, num_patches + 1, hidden)),
        "lnf_g": jnp.ones((1, hidden), jnp.float32),
        "lnf_b": jnp.zeros((1, hidden), jnp.float32),
        "cls_w": nrm(next(keys), (hidden, num_labels)),
        "cls_b": jnp.zeros((num_labels,), jnp.float32),
        "lin_w": nrm(next(keys), (in_dim, hid_dim)),      # the module's self.linear
        "lin_b": jnp.zeros((hid_dim,), jnp.float32),
        "layers": [],
    }
    for _ in range(num_layers):
        p["layers"].append({
            "ln1_g": jnp.ones((1, hidden), jnp.float32),
            "ln1_b": jnp.zeros((1, hidden), jnp.float32),
            "wqkv": nrm(next(keys), (hidden, 3 * hidden)).astype(jnp.bfloat16),
            "bqkv": jnp.zeros((1, 3 * hidden), jnp.float32),
            "wo": nrm(next(keys), (hidden, hidden)).astype(jnp.bfloat16),
            "bo": jnp.zeros((1, hidden), jnp.float32),
            "ln2_g": jnp.ones((1, hidden), jnp.float32),
            "ln2_b": jnp.zeros((1, hidden), jnp.float32),
            "w1": nrm(next(keys), (hidden, mlp_dim)).astype(jnp.bfloat16),
            "b1": jnp.zeros((1, mlp_dim), jnp.float32),
            "w2": nrm(next(keys), (mlp_dim, hidden)).astype(jnp.bfloat16),
            "b2": jnp.zeros((1, hidden), jnp.float32),
        })
    return p


@functools.partial(jax.jit, static_argnames=("patch", "heads", "layer"))
def vit_classify_forward(params, x, *, patch, heads, layer):
    """x: [B, C, H, W] (NCHW).  Returns (logits, hidden, attentions)."""
    B, C, Himg, Wimg = x.shape
    D = params["patch_w"].shape[1]
    nh, nw = Himg // patch, Wimg // patch
    n_patches = nh * nw

    # patch embedding: stride=patch conv == per-patch matmul (Pallas)
    patches = x.reshape(B, C, nh, patch, nw, patch)
    patches = patches.transpose(0, 2, 4, 1, 3, 5).reshape(B, n_patches, C * patch * patch)
    patch_emb = linear(patches, params["patch_w"], params["patch_b"])     # [B, Np, D]

    cls = jnp.broadcast_to(params["cls_token"], (B, 1, D))
    h = jnp.concatenate([cls, patch_emb], axis=1) + params["pos_emb"]     # [B, S, D]

    hidden_states = [h]   # mirrors HF `hidden_states` (embeddings + each layer)
    attentions = []       # mirrors HF `attentions`

    for lp in params["layers"]:
        h, probs = vit_block(h, lp, heads=heads)                          # ONE fused kernel
        hidden_states.append(h)
        attentions.append(probs)

    final = layernorm(h, params["lnf_g"], params["lnf_b"])                # Pallas

    # Tiny heads (N=4 / N=16 << 128 lanes): plain XLA is cheaper than a pallas_call launch.
    logits = final[:, 0, :] @ params["cls_w"] + params["cls_b"]           # CLS classifier
    hidden = hidden_states[layer] @ params["lin_w"] + params["lin_b"]     # self.linear
    # TODO(synk): the PyTorch module also stores self.embedding = all_states[args.layer]
    # as a side effect; that stateful assignment has no Pallas equivalent.
    return logits, hidden, tuple(attentions)


# ----------------------------------------------------------------------------
# Demo
# ----------------------------------------------------------------------------

if __name__ == "__main__":
    # small ViT: 16x16 image, 8x8 patches -> 4 patches (+CLS) = seq 5, hidden 32
    B, C, IMG, PATCH = 2, 3, 16, 8
    HIDDEN, HEADS, MLP, LAYERS = 32, 4, 64, 2
    OUT_DIM = 4          # num_labels / out_dim
    IN_DIM = HIDDEN      # in_dim of self.linear (applied to hidden states)
    HID_DIM = 16         # hid_dim of self.linear
    LAYER = 1            # which hidden_state to project

    key = jax.random.PRNGKey(0)
    pkey, xkey = jax.random.split(key)
    params = init_params(
        pkey, channels=C, patch=PATCH, hidden=HIDDEN, heads=HEADS, mlp_dim=MLP,
        num_layers=LAYERS, num_labels=OUT_DIM, in_dim=IN_DIM, hid_dim=HID_DIM,
        num_patches=(IMG // PATCH) ** 2,
    )
    x = jax.random.normal(xkey, (B, C, IMG, IMG), dtype=jnp.float32)

    logits, hidden, attentions = vit_classify_forward(
        params, x, patch=PATCH, heads=HEADS, layer=LAYER)
    jax.block_until_ready((logits, hidden, attentions))

    S = (IMG // PATCH) ** 2 + 1
    assert logits.shape == (B, OUT_DIM)
    assert hidden.shape == (B, S, HID_DIM)
    assert len(attentions) == LAYERS
    assert attentions[0].shape == (B, HEADS, S, S)
    assert bool(jnp.all(jnp.isfinite(logits)))
    # softmax rows sum to ~1 (approx reciprocal -> loose tolerance)
    assert bool(jnp.all(jnp.abs(attentions[0].sum(-1) - 1.0) < 2e-2))
    print("KERNEL_OK")
</pallas_src>

<mosaic_0001>
module attributes {stable_mosaic.version = 11 : i64} {
  func.func @_linear_kernel(%arg0: i32, %arg1: memref<8x192xf32, #tpu.memory_space<vmem>>, %arg2: memref<192x32xbf16, #tpu.memory_space<vmem>>, %arg3: memref<1x32xf32, #tpu.memory_space<vmem>>, %arg4: memref<8x32xf32, #tpu.memory_space<vmem>>) attributes {dimension_semantics = [#tpu.dimension_semantics<arbitrary>], iteration_bounds = array<i64: 1>, scalar_prefetch = 0 : i64, scratch_operands = 0 : i64, tpu.core_type = #tpu.core_type<tc>, window_params = [{pipeline_mode = #tpu.pipeline_mode<synchronous>, transform_indices = @transform_0, window_bounds = array<i64: 8, 192>}, {pipeline_mode = #tpu.pipeline_mode<synchronous>, transform_indices = @transform_1, window_bounds = array<i64: 192, 32>}, {pipeline_mode = #tpu.pipeline_mode<synchronous>, transform_indices = @transform_2, window_bounds = array<i64: 1, 32>}, {pipeline_mode = #tpu.pipeline_mode<synchronous>, transform_indices = @transform_3, window_bounds = array<i64: 8, 32>}]} {
    %c0 = arith.constant 0 : index
    %c0_0 = arith.constant 0 : index
    %0 = vector.load %arg1[%c0, %c0_0] : memref<8x192xf32, #tpu.memory_space<vmem>>, vector<8x192xf32>
    %c0_1 = arith.constant 0 : index
    %c0_2 = arith.constant 0 : index
    %1 = vector.load %arg2[%c0_1, %c0_2] : memref<192x32xbf16, #tpu.memory_space<vmem>>, vector<192x32xbf16>
    %2 = arith.truncf %0 : vector<8x192xf32> to vector<8x192xbf16>
    %cst = arith.constant dense<0.000000e+00> : vector<8x32xf32>
    %3 = tpu.matmul %2, %1, %cst {dimension_numbers = #tpu.dot_dimension_numbers<[1], [0], [0], [1], [0, 0, 1, 1], [], []>} : vector<8x192xbf16>, vector<192x32xbf16>, vector<8x32xf32> -> vector<8x32xf32>
    %c0_3 = arith.constant 0 : index
    %c0_4 = arith.constant 0 : index
    %4 = vector.load %arg3[%c0_3, %c0_4] : memref<1x32xf32, #tpu.memory_space<vmem>>, vector<1x32xf32>
    %5 = vector.broadcast %4 : vector<1x32xf32> to vector<8x32xf32>
    %6 = arith.addf %3, %5 : vector<8x32xf32>
    %c0_5 = arith.constant 0 : index
    %c0_6 = arith.constant 0 : index
    %7 = vector.load %arg4[%c0_5, %c0_6] : memref<8x32xf32, #tpu.memory_space<vmem>>, vector<8x32xf32>
    tpu.vector_store %arg4[%c0_5, %c0_6], %6 {strides = array<i32>} : memref<8x32xf32, #tpu.memory_space<vmem>>, vector<8x32xf32>,
    return
  }
  func.func @transform_0(%arg0: i32) -> (i32, i32) {
    %c0_i32 = arith.constant 0 : i32
    %c0_i32_0 = arith.constant 0 : i32
    %c0_i32_1 = arith.constant 0 : i32
    return %c0_i32, %c0_i32_0 : i32, i32
  }
  func.func @transform_1(%arg0: i32) -> (i32, i32) {
    %c0_i32 = arith.constant 0 : i32
    %c0_i32_0 = arith.constant 0 : i32
    %c0_i32_1 = arith.constant 0 : i32
    return %c0_i32, %c0_i32_0 : i32, i32
  }
  func.func @transform_2(%arg0: i32) -> (i32, i32) {
    %c0_i32 = arith.constant 0 : i32
    %c0_i32_0 = arith.constant 0 : i32
    %c0_i32_1 = arith.constant 0 : i32
    return %c0_i32, %c0_i32_0 : i32, i32
  }
  func.func @transform_3(%arg0: i32) -> (i32, i32) {
    %c0_i32 = arith.constant 0 : i32
    %c0_i32_0 = arith.constant 0 : i32
    %c0_i32_1 = arith.constant 0 : i32
    return %c0_i32, %c0_i32_0 : i32, i32
  }
}

module attributes {stable_mosaic.version = 11 : i64} {
  func.func @_vit_block_kernel(%arg0: i32, %arg1: memref<1x5x32xf32, #tpu.memory_space<vmem>>, %arg2: memref<1x32xf32, #tpu.memory_space<vmem>>, %arg3: memref<1x32xf32, #tpu.memory_space<vmem>>, %arg4: memref<32x96xbf16, #tpu.memory_space<vmem>>, %arg5: memref<1x96xf32, #tpu.memory_space<vmem>>, %arg6: memref<32x32xbf16, #tpu.memory_space<vmem>>, %arg7: memref<1x32xf32, #tpu.memory_space<vmem>>, %arg8: memref<1x32xf32, #tpu.memory_space<vmem>>, %arg9: memref<1x32xf32, #tpu.memory_space<vmem>>, %arg10: memref<32x64xbf16, #tpu.memory_space<vmem>>, %arg11: memref<1x64xf32, #tpu.memory_space<vmem>>, %arg12: memref<64x32xbf16, #tpu.memory_space<vmem>>, %arg13: memref<1x32xf32, #tpu.memory_space<vmem>>, %arg14: memref<1x5x32xf32, #tpu.memory_space<vmem>>, %arg15: memref<1x4x5x5xf32, #tpu.memory_space<vmem>>) attributes {dimension_semantics = [#tpu.dimension_semantics<parallel>], iteration_bounds = array<i64: 2>, scalar_prefetch = 0 : i64, scratch_operands = 0 : i64, tpu.core_type = #tpu.core_type<tc>, window_params = [{transform_indices = @transform_0, window_bounds = array<i64: 1, 5, 32>}, {pipeline_mode = #tpu.pipeline_mode<synchronous>, transform_indices = @transform_1, window_bounds = array<i64: 1, 32>}, {pipeline_mode = #tpu.pipeline_mode<synchronous>, transform_indices = @transform_2, window_bounds = array<i64: 1, 32>}, {pipeline_mode = #tpu.pipeline_mode<synchronous>, transform_indices = @transform_3, window_bounds = array<i64: 32, 96>}, {pipeline_mode = #tpu.pipeline_mode<synchronous>, transform_indices = @transform_4, window_bounds = array<i64: 1, 96>}, {pipeline_mode = #tpu.pipeline_mode<synchronous>, transform_indices = @transform_5, window_bounds = array<i64: 32, 32>}, {pipeline_mode = #tpu.pipeline_mode<synchronous>, transform_indices = @transform_6, window_bounds = array<i64: 1, 32>}, {pipeline_mode = #tpu.pipeline_mode<synchronous>, transform_indices = @transform_7, window_bounds = array<i64: 1, 32>}, {pipeline_mode = #tpu.pipeline_mode<synchronous>, transform_indices = @transform_8, window_bounds = array<i64: 1, 32>}, {pipeline_mode = #tpu.pipeline_mode<synchronous>, transform_indices = @transform_9, window_bounds = array<i64: 32, 64>}, {pipeline_mode = #tpu.pipeline_mode<synchronous>, transform_indices = @transform_10, window_bounds = array<i64: 1, 64>}, {pipeline_mode = #tpu.pipeline_mode<synchronous>, transform_indices = @transform_11, window_bounds = array<i64: 64, 32>}, {pipeline_mode = #tpu.pipeline_mode<synchronous>, transform_indices = @transform_12, window_bounds = array<i64: 1, 32>}, {transform_indices = @transform_13, window_bounds = array<i64: 1, 5, 32>}, {transform_indices = @transform_14, window_bounds = array<i64: 1, 4, 5, 5>}]} {
    %c0 = arith.constant 0 : index
    %c0_0 = arith.constant 0 : index
    %c0_1 = arith.constant 0 : index
    %0 = vector.load %arg1[%c0, %c0_0, %c0_1] : memref<1x5x32xf32, #tpu.memory_space<vmem>>, vector<1x5x32xf32>
    %1 = vector.shape_cast %0 : vector<1x5x32xf32> to vector<5x32xf32>
    %c0_2 = arith.constant 0 : index
    %c0_3 = arith.constant 0 : index
    %2 = vector.load %arg2[%c0_2, %c0_3] : memref<1x32xf32, #tpu.memory_space<vmem>>, vector<1x32xf32>
    %c0_4 = arith.constant 0 : index
    %c0_5 = arith.constant 0 : index
    %3 = vector.load %arg3[%c0_4, %c0_5] : memref<1x32xf32, #tpu.memory_space<vmem>>, vector<1x32xf32>
    %cst = arith.constant dense<0.000000e+00> : vector<5xf32>
    %4 = vector.multi_reduction <add>, %1, %cst [1] : vector<5x32xf32> to vector<5xf32>
    %5 = vector.shape_cast %4 : vector<5xf32> to vector<5x1xf32>
    %cst_6 = arith.constant 3.200000e+01 : f32
    %6 = vector.broadcast %cst_6 : f32 to vector<5x1xf32>
    %7 = arith.divf %5, %6 : vector<5x1xf32>
    %8 = vector.broadcast %7 : vector<5x1xf32> to vector<5x32xf32>
    %9 = arith.subf %1, %8 : vector<5x32xf32>
    %10 = vector.broadcast %7 : vector<5x1xf32> to vector<5x32xf32>
    %11 = arith.subf %1, %10 : vector<5x32xf32>
    %12 = arith.mulf %9, %11 : vector<5x32xf32>
    %cst_7 = arith.constant dense<0.000000e+00> : vector<5xf32>
    %13 = vector.multi_reduction <add>, %12, %cst_7 [1] : vector<5x32xf32> to vector<5xf32>
    %14 = vector.shape_cast %13 : vector<5xf32> to vector<5x1xf32>
    %cst_8 = arith.constant 3.200000e+01 : f32
    %15 = vector.broadcast %cst_8 : f32 to vector<5x1xf32>
    %16 = arith.divf %14, %15 : vector<5x1xf32>
    %17 = vector.broadcast %7 : vector<5x1xf32> to vector<5x32xf32>
    %18 = arith.subf %1, %17 : vector<5x32xf32>
    %cst_9 = arith.constant 9.99999996E-13 : f32
    %19 = vector.broadcast %cst_9 : f32 to vector<5x1xf32>
    %20 = arith.addf %16, %19 : vector<5x1xf32>
    %21 = math.rsqrt %20 : vector<5x1xf32>
    %22 = vector.broadcast %21 : vector<5x1xf32> to vector<5x32xf32>
    %23 = arith.mulf %18, %22 : vector<5x32xf32>
    %24 = vector.broadcast %2 : vector<1x32xf32> to vector<5x32xf32>
    %25 = arith.mulf %23, %24 : vector<5x32xf32>
    %26 = vector.broadcast %3 : vector<1x32xf32> to vector<5x32xf32>
    %27 = arith.addf %25, %26 : vector<5x32xf32>
    %28 = arith.truncf %27 : vector<5x32xf32> to vector<5x32xbf16>
    %c0_10 = arith.constant 0 : index
    %c0_11 = arith.constant 0 : index
    %29 = vector.load %arg4[%c0_10, %c0_11] : memref<32x96xbf16, #tpu.memory_space<vmem>>, vector<32x96xbf16>
    %cst_12 = arith.constant dense<0.000000e+00> : vector<5x96xf32>
    %30 = tpu.matmul %28, %29, %cst_12 {dimension_numbers = #tpu.dot_dimension_numbers<[1], [0], [0], [1], [0, 0, 1, 1], [], []>} : vector<5x32xbf16>, vector<32x96xbf16>, vector<5x96xf32> -> vector<5x96xf32>
    %c0_13 = arith.constant 0 : index
    %c0_14 = arith.constant 0 : index
    %31 = vector.load %arg5[%c0_13, %c0_14] : memref<1x96xf32, #tpu.memory_space<vmem>>, vector<1x96xf32>
    %32 = vector.broadcast %31 : vector<1x96xf32> to vector<5x96xf32>
    %33 = arith.addf %30, %32 : vector<5x96xf32>
    %34 = vector.extract_strided_slice %33 {offsets = [0, 0], sizes = [5, 32], strides = [1, 1]} : vector<5x96xf32> to vector<5x32xf32>
    %cst_15 = arith.constant 0.353553385 : f32
    %35 = vector.broadcast %cst_15 : f32 to vector<5x32xf32>
    %36 = arith.mulf %34, %35 : vector<5x32xf32>
    %37 = arith.truncf %36 : vector<5x32xf32> to vector<5x32xbf16>
    %38 = vector.extract_strided_slice %33 {offsets = [0, 32], sizes = [5, 32], strides = [1, 1]} : vector<5x96xf32> to vector<5x32xf32>
    %39 = arith.truncf %38 : vector<5x32xf32> to vector<5x32xbf16>
    %40 = vector.extract_strided_slice %33 {offsets = [0, 64], sizes = [5, 32], strides = [1, 1]} : vector<5x96xf32> to vector<5x32xf32>
    %41 = arith.truncf %40 : vector<5x32xf32> to vector<5x32xbf16>
    %42 = vector.extract_strided_slice %37 {offsets = [0, 0], sizes = [5, 8], strides = [1, 1]} : vector<5x32xbf16> to vector<5x8xbf16>
    %43 = vector.extract_strided_slice %39 {offsets = [0, 0], sizes = [5, 8], strides = [1, 1]} : vector<5x32xbf16> to vector<5x8xbf16>
    %cst_16 = arith.constant dense<0.000000e+00> : vector<5x5xf32>
    %44 = tpu.matmul %42, %43, %cst_16 {dimension_numbers = #tpu.dot_dimension_numbers<[1], [1], [0], [0], [0, 0, 1, 0], [], []>} : vector<5x8xbf16>, vector<5x8xbf16>, vector<5x5xf32> -> vector<5x5xf32>
    %cst_17 = arith.constant dense<0xFF800000> : vector<5xf32>
    %45 = vector.multi_reduction <maximumf>, %44, %cst_17 [1] : vector<5x5xf32> to vector<5xf32>
    %46 = vector.shape_cast %45 : vector<5xf32> to vector<5x1xf32>
    %47 = vector.broadcast %46 : vector<5x1xf32> to vector<5x5xf32>
    %48 = arith.subf %44, %47 : vector<5x5xf32>
    %49 = math.exp %48 : vector<5x5xf32>
    %cst_18 = arith.constant dense<0.000000e+00> : vector<5xf32>
    %50 = vector.multi_reduction <add>, %49, %cst_18 [1] : vector<5x5xf32> to vector<5xf32>
    %51 = vector.shape_cast %50 : vector<5xf32> to vector<5x1xf32>
    %52 = tpu.reciprocal %51 {approx = true} : vector<5x1xf32> -> vector<5x1xf32>
    %53 = vector.broadcast %52 : vector<5x1xf32> to vector<5x5xf32>
    %54 = arith.mulf %49, %53 : vector<5x5xf32>
    %c0_19 = arith.constant 0 : index
    %c0_20 = arith.constant 0 : index
    %c0_21 = arith.constant 0 : index
    %c0_22 = arith.constant 0 : index
    %55 = vector.load %arg15[%c0_19, %c0_20, %c0_21, %c0_22] : memref<1x4x5x5xf32, #tpu.memory_space<vmem>>, vector<1x1x5x5xf32>
    %56 = vector.shape_cast %55 : vector<1x1x5x5xf32> to vector<5x5xf32>
    %57 = vector.shape_cast %54 : vector<5x5xf32> to vector<1x1x5x5xf32>
    tpu.vector_store %arg15[%c0_19, %c0_20, %c0_21, %c0_22], %57 {strides = array<i32>} : memref<1x4x5x5xf32, #tpu.memory_space<vmem>>, vector<1x1x5x5xf32>,
    %58 = arith.truncf %54 : vector<5x5xf32> to vector<5x5xbf16>
    %59 = vector.extract_strided_slice %41 {offsets = [0, 0], sizes = [5, 8], strides = [1, 1]} : vector<5x32xbf16> to vector<5x8xbf16>
    %cst_23 = arith.constant dense<0.000000e+00> : vector<5x8xf32>
    %60 = tpu.matmul %58, %59, %cst_23 {dimension_numbers = #tpu.dot_dimension_numbers<[1], [0], [0], [1], [0, 0, 1, 1], [], []>} : vector<5x5xbf16>, vector<5x8xbf16>, vector<5x8xf32> -> vector<5x8xf32>
    %61 = vector.extract_strided_slice %37 {offsets = [0, 8], sizes = [5, 8], strides = [1, 1]} : vector<5x32xbf16> to vector<5x8xbf16>
    %62 = vector.extract_strided_slice %39 {offsets = [0, 8], sizes = [5, 8], strides = [1, 1]} : vector<5x32xbf16> to vector<5x8xbf16>
    %cst_24 = arith.constant dense<0.000000e+00> : vector<5x5xf32>
    %63 = tpu.matmul %61, %62, %cst_24 {dimension_numbers = #tpu.dot_dimension_numbers<[1], [1], [0], [0], [0, 0, 1, 0], [], []>} : vector<5x8xbf16>, vector<5x8xbf16>, vector<5x5xf32> -> vector<5x5xf32>
    %cst_25 = arith.constant dense<0xFF800000> : vector<5xf32>
    %64 = vector.multi_reduction <maximumf>, %63, %cst_25 [1] : vector<5x5xf32> to vector<5xf32>
    %65 = vector.shape_cast %64 : vector<5xf32> to vector<5x1xf32>
    %66 = vector.broadcast %65 : vector<5x1xf32> to vector<5x5xf32>
    %67 = arith.subf %63, %66 : vector<5x5xf32>
    %68 = math.exp %67 : vector<5x5xf32>
    %cst_26 = arith.constant dense<0.000000e+00> : vector<5xf32>
    %69 = vector.multi_reduction <add>, %68, %cst_26 [1] : vector<5x5xf32> to vector<5xf32>
    %70 = vector.shape_cast %69 : vector<5xf32> to vector<5x1xf32>
    %71 = tpu.reciprocal %70 {approx = true} : vector<5x1xf32> -> vector<5x1xf32>
    %72 = vector.broadcast %71 : vector<5x1xf32> to vector<5x5xf32>
    %73 = arith.mulf %68, %72 : vector<5x5xf32>
    %c0_27 = arith.constant 0 : index
    %c1 = arith.constant 1 : index
    %c0_28 = arith.constant 0 : index
    %c0_29 = arith.constant 0 : index
    %74 = vector.load %arg15[%c0_27, %c1, %c0_28, %c0_29] : memref<1x4x5x5xf32, #tpu.memory_space<vmem>>, vector<1x1x5x5xf32>
    %75 = vector.shape_cast %74 : vector<1x1x5x5xf32> to vector<5x5xf32>
    %76 = vector.shape_cast %73 : vector<5x5xf32> to vector<1x1x5x5xf32>
    tpu.vector_store %arg15[%c0_27, %c1, %c0_28, %c0_29], %76 {strides = array<i32>} : memref<1x4x5x5xf32, #tpu.memory_space<vmem>>, vector<1x1x5x5xf32>,
    %77 = arith.truncf %73 : vector<5x5xf32> to vector<5x5xbf16>
    %78 = vector.extract_strided_slice %41 {offsets = [0, 8], sizes = [5, 8], strides = [1, 1]} : vector<5x32xbf16> to vector<5x8xbf16>
    %cst_30 = arith.constant dense<0.000000e+00> : vector<5x8xf32>
    %79 = tpu.matmul %77, %78, %cst_30 {dimension_numbers = #tpu.dot_dimension_numbers<[1], [0], [0], [1], [0, 0, 1, 1], [], []>} : vector<5x5xbf16>, vector<5x8xbf16>, vector<5x8xf32> -> vector<5x8xf32>
    %80 = vector.extract_strided_slice %37 {offsets = [0, 16], sizes = [5, 8], strides = [1, 1]} : vector<5x32xbf16> to vector<5x8xbf16>
    %81 = vector.extract_strided_slice %39 {offsets = [0, 16], sizes = [5, 8], strides = [1, 1]} : vector<5x32xbf16> to vector<5x8xbf16>
    %cst_31 = arith.constant dense<0.000000e+00> : vector<5x5xf32>
    %82 = tpu.matmul %80, %81, %cst_31 {dimension_numbers = #tpu.dot_dimension_numbers<[1], [1], [0], [0], [0, 0, 1, 0], [], []>} : vector<5x8xbf16>, vector<5x8xbf16>, vector<5x5xf32> -> vector<5x5xf32>
    %cst_32 = arith.constant dense<0xFF800000> : vector<5xf32>
    %83 = vector.multi_reduction <maximumf>, %82, %cst_32 [1] : vector<5x5xf32> to vector<5xf32>
    %84 = vector.shape_cast %83 : vector<5xf32> to vector<5x1xf32>
    %85 = vector.broadcast %84 : vector<5x1xf32> to vector<5x5xf32>
    %86 = arith.subf %82, %85 : vector<5x5xf32>
    %87 = math.exp %86 : vector<5x5xf32>
    %cst_33 = arith.constant dense<0.000000e+00> : vector<5xf32>
    %88 = vector.multi_reduction <add>, %87, %cst_33 [1] : vector<5x5xf32> to vector<5xf32>
    %89 = vector.shape_cast %88 : vector<5xf32> to vector<5x1xf32>
    %90 = tpu.reciprocal %89 {approx = true} : vector<5x1xf32> -> vector<5x1xf32>
    %91 = vector.broadcast %90 : vector<5x1xf32> to vector<5x5xf32>
    %92 = arith.mulf %87, %91 : vector<5x5xf32>
    %c0_34 = arith.constant 0 : index
    %c2 = arith.constant 2 : index
    %c0_35 = arith.constant 0 : index
    %c0_36 = arith.constant 0 : index
    %93 = vector.load %arg15[%c0_34, %c2, %c0_35, %c0_36] : memref<1x4x5x5xf32, #tpu.memory_space<vmem>>, vector<1x1x5x5xf32>
    %94 = vector.shape_cast %93 : vector<1x1x5x5xf32> to vector<5x5xf32>
    %95 = vector.shape_cast %92 : vector<5x5xf32> to vector<1x1x5x5xf32>
    tpu.vector_store %arg15[%c0_34, %c2, %c0_35, %c0_36], %95 {strides = array<i32>} : memref<1x4x5x5xf32, #tpu.memory_space<vmem>>, vector<1x1x5x5xf32>,
    %96 = arith.truncf %92 : vector<5x5xf32> to vector<5x5xbf16>
    %97 = vector.extract_strided_slice %41 {offsets = [0, 16], sizes = [5, 8], strides = [1, 1]} : vector<5x32xbf16> to vector<5x8xbf16>
    %cst_37 = arith.constant dense<0.000000e+00> : vector<5x8xf32>
    %98 = tpu.matmul %96, %97, %cst_37 {dimension_numbers = #tpu.dot_dimension_numbers<[1], [0], [0], [1], [0, 0, 1, 1], [], []>} : vector<5x5xbf16>, vector<5x8xbf16>, vector<5x8xf32> -> vector<5x8xf32>
    %99 = vector.extract_strided_slice %37 {offsets = [0, 24], sizes = [5, 8], strides = [1, 1]} : vector<5x32xbf16> to vector<5x8xbf16>
    %100 = vector.extract_strided_slice %39 {offsets = [0, 24], sizes = [5, 8], strides = [1, 1]} : vector<5x32xbf16> to vector<5x8xbf16>
    %cst_38 = arith.constant dense<0.000000e+00> : vector<5x5xf32>
    %101 = tpu.matmul %99, %100, %cst_38 {dimension_numbers = #tpu.dot_dimension_numbers<[1], [1], [0], [0], [0, 0, 1, 0], [], []>} : vector<5x8xbf16>, vector<5x8xbf16>, vector<5x5xf32> -> vector<5x5xf32>
    %cst_39 = arith.constant dense<0xFF800000> : vector<5xf32>
    %102 = vector.multi_reduction <maximumf>, %101, %cst_39 [1] : vector<5x5xf32> to vector<5xf32>
    %103 = vector.shape_cast %102 : vector<5xf32> to vector<5x1xf32>
    %104 = vector.broadcast %103 : vector<5x1xf32> to vector<5x5xf32>
    %105 = arith.subf %101, %104 : vector<5x5xf32>
    %106 = math.exp %105 : vector<5x5xf32>
    %cst_40 = arith.constant dense<0.000000e+00> : vector<5xf32>
    %107 = vector.multi_reduction <add>, %106, %cst_40 [1] : vector<5x5xf32> to vector<5xf32>
    %108 = vector.shape_cast %107 : vector<5xf32> to vector<5x1xf32>
    %109 = tpu.reciprocal %108 {approx = true} : vector<5x1xf32> -> vector<5x1xf32>
    %110 = vector.broadcast %109 : vector<5x1xf32> to vector<5x5xf32>
    %111 = arith.mulf %106, %110 : vector<5x5xf32>
    %c0_41 = arith.constant 0 : index
    %c3 = arith.constant 3 : index
    %c0_42 = arith.constant 0 : index
    %c0_43 = arith.constant 0 : index
    %112 = vector.load %arg15[%c0_41, %c3, %c0_42, %c0_43] : memref<1x4x5x5xf32, #tpu.memory_space<vmem>>, vector<1x1x5x5xf32>
    %113 = vector.shape_cast %112 : vector<1x1x5x5xf32> to vector<5x5xf32>
    %114 = vector.shape_cast %111 : vector<5x5xf32> to vector<1x1x5x5xf32>
    tpu.vector_store %arg15[%c0_41, %c3, %c0_42, %c0_43], %114 {strides = array<i32>} : memref<1x4x5x5xf32, #tpu.memory_space<vmem>>, vector<1x1x5x5xf32>,
    %115 = arith.truncf %111 : vector<5x5xf32> to vector<5x5xbf16>
    %116 = vector.extract_strided_slice %41 {offsets = [0, 24], sizes = [5, 8], strides = [1, 1]} : vector<5x32xbf16> to vector<5x8xbf16>
    %cst_44 = arith.constant dense<0.000000e+00> : vector<5x8xf32>
    %117 = tpu.matmul %115, %116, %cst_44 {dimension_numbers = #tpu.dot_dimension_numbers<[1], [0], [0], [1], [0, 0, 1, 1], [], []>} : vector<5x5xbf16>, vector<5x8xbf16>, vector<5x8xf32> -> vector<5x8xf32>
    %118 = tpu.concatenate %60, %79, %98, %117 in 1 : vector<5x8xf32>, vector<5x8xf32>, vector<5x8xf32>, vector<5x8xf32> -> vector<5x32xf32>
    %119 = arith.truncf %118 : vector<5x32xf32> to vector<5x32xbf16>
    %c0_45 = arith.constant 0 : index
    %c0_46 = arith.constant 0 : index
    %120 = vector.load %arg6[%c0_45, %c0_46] : memref<32x32xbf16, #tpu.memory_space<vmem>>, vector<32x32xbf16>
    %cst_47 = arith.constant dense<0.000000e+00> : vector<5x32xf32>
    %121 = tpu.matmul %119, %120, %cst_47 {dimension_numbers = #tpu.dot_dimension_numbers<[1], [0], [0], [1], [0, 0, 1, 1], [], []>} : vector<5x32xbf16>, vector<32x32xbf16>, vector<5x32xf32> -> vector<5x32xf32>
    %c0_48 = arith.constant 0 : index
    %c0_49 = arith.constant 0 : index
    %122 = vector.load %arg7[%c0_48, %c0_49] : memref<1x32xf32, #tpu.memory_space<vmem>>, vector<1x32xf32>
    %123 = vector.broadcast %122 : vector<1x32xf32> to vector<5x32xf32>
    %124 = arith.addf %121, %123 : vector<5x32xf32>
    %125 = arith.addf %1, %124 : vector<5x32xf32>
    %c0_50 = arith.constant 0 : index
    %c0_51 = arith.constant 0 : index
    %126 = vector.load %arg8[%c0_50, %c0_51] : memref<1x32xf32, #tpu.memory_space<vmem>>, vector<1x32xf32>
    %c0_52 = arith.constant 0 : index
    %c0_53 = arith.constant 0 : index
    %127 = vector.load %arg9[%c0_52, %c0_53] : memref<1x32xf32, #tpu.memory_space<vmem>>, vector<1x32xf32>
    %cst_54 = arith.constant dense<0.000000e+00> : vector<5xf32>
    %128 = vector.multi_reduction <add>, %125, %cst_54 [1] : vector<5x32xf32> to vector<5xf32>
    %129 = vector.shape_cast %128 : vector<5xf32> to vector<5x1xf32>
    %cst_55 = arith.constant 3.200000e+01 : f32
    %130 = vector.broadcast %cst_55 : f32 to vector<5x1xf32>
    %131 = arith.divf %129, %130 : vector<5x1xf32>
    %132 = vector.broadcast %131 : vector<5x1xf32> to vector<5x32xf32>
    %133 = arith.subf %125, %132 : vector<5x32xf32>
    %134 = vector.broadcast %131 : vector<5x1xf32> to vector<5x32xf32>
    %135 = arith.subf %125, %134 : vector<5x32xf32>
    %136 = arith.mulf %133, %135 : vector<5x32xf32>
    %cst_56 = arith.constant dense<0.000000e+00> : vector<5xf32>
    %137 = vector.multi_reduction <add>, %136, %cst_56 [1] : vector<5x32xf32> to vector<5xf32>
    %138 = vector.shape_cast %137 : vector<5xf32> to vector<5x1xf32>
    %cst_57 = arith.constant 3.200000e+01 : f32
    %139 = vector.broadcast %cst_57 : f32 to vector<5x1xf32>
    %140 = arith.divf %138, %139 : vector<5x1xf32>
    %141 = vector.broadcast %131 : vector<5x1xf32> to vector<5x32xf32>
    %142 = arith.subf %125, %141 : vector<5x32xf32>
    %cst_58 = arith.constant 9.99999996E-13 : f32
    %143 = vector.broadcast %cst_58 : f32 to vector<5x1xf32>
    %144 = arith.addf %140, %143 : vector<5x1xf32>
    %145 = math.rsqrt %144 : vector<5x1xf32>
    %146 = vector.broadcast %145 : vector<5x1xf32> to vector<5x32xf32>
    %147 = arith.mulf %142, %146 : vector<5x32xf32>
    %148 = vector.broadcast %126 : vector<1x32xf32> to vector<5x32xf32>
    %149 = arith.mulf %147, %148 : vector<5x32xf32>
    %150 = vector.broadcast %127 : vector<1x32xf32> to vector<5x32xf32>
    %151 = arith.addf %149, %150 : vector<5x32xf32>
    %152 = arith.truncf %151 : vector<5x32xf32> to vector<5x32xbf16>
    %c0_59 = arith.constant 0 : index
    %c0_60 = arith.constant 0 : index
    %153 = vector.load %arg10[%c0_59, %c0_60] : memref<32x64xbf16, #tpu.memory_space<vmem>>, vector<32x64xbf16>
    %cst_61 = arith.constant dense<0.000000e+00> : vector<5x64xf32>
    %154 = tpu.matmul %152, %153, %cst_61 {dimension_numbers = #tpu.dot_dimension_numbers<[1], [0], [0], [1], [0, 0, 1, 1], [], []>} : vector<5x32xbf16>, vector<32x64xbf16>, vector<5x64xf32> -> vector<5x64xf32>
    %c0_62 = arith.constant 0 : index
    %c0_63 = arith.constant 0 : index
    %155 = vector.load %arg11[%c0_62, %c0_63] : memref<1x64xf32, #tpu.memory_space<vmem>>, vector<1x64xf32>
    %156 = vector.broadcast %155 : vector<1x64xf32> to vector<5x64xf32>
    %157 = arith.addf %154, %156 : vector<5x64xf32>
    %cst_64 = arith.constant 5.000000e-01 : f32
    %158 = vector.broadcast %cst_64 : f32 to vector<5x64xf32>
    %159 = arith.mulf %158, %157 : vector<5x64xf32>
    %cst_65 = arith.constant 4.471500e-02 : f32
    %160 = vector.broadcast %cst_65 : f32 to vector<5x64xf32>
    %161 = arith.mulf %160, %157 : vector<5x64xf32>
    %162 = arith.mulf %161, %157 : vector<5x64xf32>
    %163 = arith.mulf %162, %157 : vector<5x64xf32>
    %164 = arith.addf %157, %163 : vector<5x64xf32>
    %cst_66 = arith.constant 0.797884583 : f32
    %165 = vector.broadcast %cst_66 : f32 to vector<5x64xf32>
    %166 = arith.mulf %165, %164 : vector<5x64xf32>
    %167 = math.tanh %166 : vector<5x64xf32>
    %cst_67 = arith.constant 1.000000e+00 : f32
    %168 = vector.broadcast %cst_67 : f32 to vector<5x64xf32>
    %169 = arith.addf %168, %167 : vector<5x64xf32>
    %170 = arith.mulf %159, %169 : vector<5x64xf32>
    %171 = arith.truncf %170 : vector<5x64xf32> to vector<5x64xbf16>
    %c0_68 = arith.constant 0 : index
    %c0_69 = arith.constant 0 : index
    %172 = vector.load %arg12[%c0_68, %c0_69] : memref<64x32xbf16, #tpu.memory_space<vmem>>, vector<64x32xbf16>
    %cst_70 = arith.constant dense<0.000000e+00> : vector<5x32xf32>
    %173 = tpu.matmul %171, %172, %cst_70 {dimension_numbers = #tpu.dot_dimension_numbers<[1], [0], [0], [1], [0, 0, 1, 1], [], []>} : vector<5x64xbf16>, vector<64x32xbf16>, vector<5x32xf32> -> vector<5x32xf32>
    %c0_71 = arith.constant 0 : index
    %c0_72 = arith.constant 0 : index
    %174 = vector.load %arg13[%c0_71, %c0_72] : memref<1x32xf32, #tpu.memory_space<vmem>>, vector<1x32xf32>
    %175 = vector.broadcast %174 : vector<1x32xf32> to vector<5x32xf32>
    %176 = arith.addf %173, %175 : vector<5x32xf32>
    %177 = arith.addf %125, %176 : vector<5x32xf32>
    %c0_73 = arith.constant 0 : index
    %c0_74 = arith.constant 0 : index
    %c0_75 = arith.constant 0 : index
    %178 = vector.load %arg14[%c0_73, %c0_74, %c0_75] : memref<1x5x32xf32, #tpu.memory_space<vmem>>, vector<1x5x32xf32>
    %179 = vector.shape_cast %178 : vector<1x5x32xf32> to vector<5x32xf32>
    %180 = vector.shape_cast %177 : vector<5x32xf32> to vector<1x5x32xf32>
    tpu.vector_store %arg14[%c0_73, %c0_74, %c0_75], %180 {strides = array<i32>} : memref<1x5x32xf32, #tpu.memory_space<vmem>>, vector<1x5x32xf32>,
    return
  }
  func.func @transform_0(%arg0: i32) -> (i32, i32, i32) {
    %c0_i32 = arith.constant 0 : i32
    %c0_i32_0 = arith.constant 0 : i32
    %c0_i32_1 = arith.constant 0 : i32
    return %arg0, %c0_i32, %c0_i32_0 : i32, i32, i32
  }
  func.func @transform_1(%arg0: i32) -> (i32, i32) {
    %c0_i32 = arith.constant 0 : i32
    %c0_i32_0 = arith.constant 0 : i32
    %c0_i32_1 = arith.constant 0 : i32
    return %c0_i32, %c0_i32_0 : i32, i32
  }
  func.func @transform_2(%arg0: i32) -> (i32, i32) {
    %c0_i32 = arith.constant 0 : i32
    %c0_i32_0 = arith.constant 0 : i32
    %c0_i32_1 = arith.constant 0 : i32
    return %c0_i32, %c0_i32_0 : i32, i32
  }
  func.func @transform_3(%arg0: i32) -> (i32, i32) {
    %c0_i32 = arith.constant 0 : i32
    %c0_i32_0 = arith.constant 0 : i32
    %c0_i32_1 = arith.constant 0 : i32
    return %c0_i32, %c0_i32_0 : i32, i32
  }
  func.func @transform_4(%arg0: i32) -> (i32, i32) {
    %c0_i32 = arith.constant 0 : i32
    %c0_i32_0 = arith.constant 0 : i32
    %c0_i32_1 = arith.constant 0 : i32
    return %c0_i32, %c0_i32_0 : i32, i32
  }
  func.func @transform_5(%arg0: i32) -> (i32, i32) {
    %c0_i32 = arith.constant 0 : i32
    %c0_i32_0 = arith.constant 0 : i32
    %c0_i32_1 = arith.constant 0 : i32
    return %c0_i32, %c0_i32_0 : i32, i32
  }
  func.func @transform_6(%arg0: i32) -> (i32, i32) {
    %c0_i32 = arith.constant 0 : i32
    %c0_i32_0 = arith.constant 0 : i32
    %c0_i32_1 = arith.constant 0 : i32
    return %c0_i32, %c0_i32_0 : i32, i32
  }
  func.func @transform_7(%arg0: i32) -> (i32, i32) {
    %c0_i32 = arith.constant 0 : i32
    %c0_i32_0 = arith.constant 0 : i32
    %c0_i32_1 = arith.constant 0 : i32
    return %c0_i32, %c0_i32_0 : i32, i32
  }
  func.func @transform_8(%arg0: i32) -> (i32, i32) {
    %c0_i32 = arith.constant 0 : i32
    %c0_i32_0 = arith.constant 0 : i32
    %c0_i32_1 = arith.constant 0 : i32
    return %c0_i32, %c0_i32_0 : i32, i32
  }
  func.func @transform_9(%arg0: i32) -> (i32, i32) {
    %c0_i32 = arith.constant 0 : i32
    %c0_i32_0 = arith.constant 0 : i32
    %c0_i32_1 = arith.constant 0 : i32
    return %c0_i32, %c0_i32_0 : i32, i32
  }
  func.func @transform_10(%arg0: i32) -> (i32, i32) {
    %c0_i32 = arith.constant 0 : i32
    %c0_i32_0 = arith.constant 0 : i32
    %c0_i32_1 = arith.constant 0 : i32
    return %c0_i32, %c0_i32_0 : i32, i32
  }
  func.func @transform_11(%arg0: i32) -> (i32, i32) {
    %c0_i32 = arith.constant 0 : i32
    %c0_i32_0 = arith.constant 0 : i32
    %c0_i32_1 = arith.constant 0 : i32
    return %c0_i32, %c0_i32_0 : i32, i32
  }
  func.func @transform_12(%arg0: i32) -> (i32, i32) {
    %c0_i32 = arith.constant 0 : i32
    %c0_i32_0 = arith.constant 0 : i32
    %c0_i32_1 = arith.constant 0 : i32
    return %c0_i32, %c0_i32_0 : i32, i32
  }
  func.func @transform_13(%arg0: i32) -> (i32, i32, i32) {
    %c0_i32 = arith.constant 0 : i32
    %c0_i32_0 = arith.constant 0 : i32
    %c0_i32_1 = arith.constant 0 : i32
    return %arg0, %c0_i32, %c0_i32_0 : i32, i32, i32
  }
  func.func @transform_14(%arg0: i32) -> (i32, i32, i32, i32) {
    %c0_i32 = arith.constant 0 : i32
    %c0_i32_0 = arith.constant 0 : i32
    %c0_i32_1 = arith.constant 0 : i32
    %c0_i32_2 = arith.constant 0 : i32
    return %arg0, %c0_i32, %c0_i32_0, %c0_i32_1 : i32, i32, i32, i32
  }
}

module attributes {stable_mosaic.version = 11 : i64} {
  func.func @_layernorm_kernel(%arg0: i32, %arg1: memref<10x32xf32, #tpu.memory_space<vmem>>, %arg2: memref<1x32xf32, #tpu.memory_space<vmem>>, %arg3: memref<1x32xf32, #tpu.memory_space<vmem>>, %arg4: memref<10x32xf32, #tpu.memory_space<vmem>>) attributes {dimension_semantics = [#tpu.dimension_semantics<arbitrary>], iteration_bounds = array<i64: 1>, scalar_prefetch = 0 : i64, scratch_operands = 0 : i64, tpu.core_type = #tpu.core_type<tc>, window_params = [{pipeline_mode = #tpu.pipeline_mode<synchronous>, transform_indices = @transform_0, window_bounds = array<i64: 10, 32>}, {pipeline_mode = #tpu.pipeline_mode<synchronous>, transform_indices = @transform_1, window_bounds = array<i64: 1, 32>}, {pipeline_mode = #tpu.pipeline_mode<synchronous>, transform_indices = @transform_2, window_bounds = array<i64: 1, 32>}, {pipeline_mode = #tpu.pipeline_mode<synchronous>, transform_indices = @transform_3, window_bounds = array<i64: 10, 32>}]} {
    %c0 = arith.constant 0 : index
    %c0_0 = arith.constant 0 : index
    %0 = vector.load %arg1[%c0, %c0_0] : memref<10x32xf32, #tpu.memory_space<vmem>>, vector<10x32xf32>
    %c0_1 = arith.constant 0 : index
    %c0_2 = arith.constant 0 : index
    %1 = vector.load %arg2[%c0_1, %c0_2] : memref<1x32xf32, #tpu.memory_space<vmem>>, vector<1x32xf32>
    %c0_3 = arith.constant 0 : index
    %c0_4 = arith.constant 0 : index
    %2 = vector.load %arg3[%c0_3, %c0_4] : memref<1x32xf32, #tpu.memory_space<vmem>>, vector<1x32xf32>
    %cst = arith.constant dense<0.000000e+00> : vector<10xf32>
    %3 = vector.multi_reduction <add>, %0, %cst [1] : vector<10x32xf32> to vector<10xf32>
    %4 = vector.shape_cast %3 : vector<10xf32> to vector<10x1xf32>
    %cst_5 = arith.constant 3.200000e+01 : f32
    %5 = vector.broadcast %cst_5 : f32 to vector<10x1xf32>
    %6 = arith.divf %4, %5 : vector<10x1xf32>
    %7 = vector.broadcast %6 : vector<10x1xf32> to vector<10x32xf32>
    %8 = arith.subf %0, %7 : vector<10x32xf32>
    %9 = vector.broadcast %6 : vector<10x1xf32> to vector<10x32xf32>
    %10 = arith.subf %0, %9 : vector<10x32xf32>
    %11 = arith.mulf %8, %10 : vector<10x32xf32>
    %cst_6 = arith.constant dense<0.000000e+00> : vector<10xf32>
    %12 = vector.multi_reduction <add>, %11, %cst_6 [1] : vector<10x32xf32> to vector<10xf32>
    %13 = vector.shape_cast %12 : vector<10xf32> to vector<10x1xf32>
    %cst_7 = arith.constant 3.200000e+01 : f32
    %14 = vector.broadcast %cst_7 : f32 to vector<10x1xf32>
    %15 = arith.divf %13, %14 : vector<10x1xf32>
    %16 = vector.broadcast %6 : vector<10x1xf32> to vector<10x32xf32>
    %17 = arith.subf %0, %16 : vector<10x32xf32>
    %cst_8 = arith.constant 9.99999996E-13 : f32
    %18 = vector.broadcast %cst_8 : f32 to vector<10x1xf32>
    %19 = arith.addf %15, %18 : vector<10x1xf32>
    %20 = math.rsqrt %19 : vector<10x1xf32>
    %21 = vector.broadcast %20 : vector<10x1xf32> to vector<10x32xf32>
    %22 = arith.mulf %17, %21 : vector<10x32xf32>
    %23 = vector.broadcast %1 : vector<1x32xf32> to vector<10x32xf32>
    %24 = arith.mulf %22, %23 : vector<10x32xf32>
    %25 = vector.broadcast %2 : vector<1x32xf32> to vector<10x32xf32>
    %26 = arith.addf %24, %25 : vector<10x32xf32>
    %c0_9 = arith.constant 0 : index
    %c0_10 = arith.constant 0 : index
    %27 = vector.load %arg4[%c0_9, %c0_10] : memref<10x32xf32, #tpu.memory_space<vmem>>, vector<10x32xf32>
    tpu.vector_store %arg4[%c0_9, %c0_10], %26 {strides = array<i32>} : memref<10x32xf32, #tpu.memory_space<vmem>>, vector<10x32xf32>,
    return
  }
  func.func @transform_0(%arg0: i32) -> (i32, i32) {
    %c0_i32 = arith.constant 0 : i32
    %c0_i32_0 = arith.constant 0 : i32
    %c0_i32_1 = arith.constant 0 : i32
    return %c0_i32, %c0_i32_0 : i32, i32
  }
  func.func @transform_1(%arg0: i32) -> (i32, i32) {
    %c0_i32 = arith.constant 0 : i32
    %c0_i32_0 = arith.constant 0 : i32
    %c0_i32_1 = arith.constant 0 : i32
    return %c0_i32, %c0_i32_0 : i32, i32
  }
  func.func @transform_2(%arg0: i32) -> (i32, i32) {
    %c0_i32 = arith.constant 0 : i32
    %c0_i32_0 = arith.constant 0 : i32
    %c0_i32_1 = arith.constant 0 : i32
    return %c0_i32, %c0_i32_0 : i32, i32
  }
  func.func @transform_3(%arg0: i32) -> (i32, i32) {
    %c0_i32 = arith.constant 0 : i32
    %c0_i32_0 = arith.constant 0 : i32
    %c0_i32_1 = arith.constant 0 : i32
    return %c0_i32, %c0_i32_0 : i32, i32
  }
}

</mosaic_0001>

<llo_original>
// kernel: vit_classify_forward.4
$region0: #{vit_classify_forward.4}
  #allocation0 [shape = 'u32[]', space=smem, size = 0x4, offset = 0x4, fixed_abs, tag = 'smem constant byte address 0x4 - core index']
  #allocation1 [shape = 'u32[72,128]{1,0:T(1,128)}', space=vmem, size = 0x9000, scoped, tag = 'internal scratch']
  %s0 = inlined_call_operand.vmem [shape: f32[8,192], index: 0, kind: input, shape index: {}]
  %s1 = inlined_call_operand.vmem [shape: bf16[192,32], index: 1, kind: input, shape index: {}]
  %s2 = inlined_call_operand.vmem [shape: f32[1,32], index: 2, kind: input, shape index: {}]
  %s3 = inlined_call_operand.vmem [shape: f32[8,32], index: 3, kind: output, shape index: {}]
  %s4 = sld [smem:[#allocation0]]
  $region22: #{vit_classify_forward.4} parent=0
    _
  %s6 = ssub.s32 1, %s4
  %s7 = scalar_select 0, %s6, %s4
  // Predicated region
  $region2: #{vit_classify_forward.4} parent=0 // pred_check
    _
  $region3: #{vit_classify_forward.4} parent=0 // pred_check_branch
    %9 = sbr.rel (0) target = $region5
  $region4: #{vit_classify_forward.4} parent=0 // pred_region
    _
  $region5: #{vit_classify_forward.4} parent=0 // pred_fallthru
    _
  // Predicated region
  $region6: #{vit_classify_forward.4} parent=0 // pred_check
    _
  $region7: #{vit_classify_forward.4} parent=0 // pred_check_branch
    %11 = sbr.rel (0) target = $region9
  $region8: #{vit_classify_forward.4} parent=0 // pred_region
    _
  $region9: #{vit_classify_forward.4} parent=0 // pred_fallthru
    _
  // Predicated region
  $region10: #{vit_classify_forward.4} parent=0 // pred_check
    _
  $region11: #{vit_classify_forward.4} parent=0 // pred_check_branch
    %13 = sbr.rel (0) target = $region13
  $region12: #{vit_classify_forward.4} parent=0 // pred_region
    _
  $region13: #{vit_classify_forward.4} parent=0 // pred_fallthru
    _
  %v15 = vld [vmem:[%s0] sm:$0xff]
  %v16 = vld [vmem:[%s0 + $0x8] sm:$0xff]
  %v17 = vld [vmem:[%s1] sm:$0xf]
  %v18 = vld [vmem:[%s1 + $0x4] sm:$0xf]
  %v19 = vld [vmem:[%s1 + $0x8] sm:$0xf]
  %v20 = vld [vmem:[%s1 + $0xc] sm:$0xf]
  %v21 = vld [vmem:[%s1 + $0x10] sm:$0xf]
  %v22 = vld [vmem:[%s1 + $0x14] sm:$0xf]
  %v23 = vld [vmem:[%s1 + $0x18] sm:$0xf]
  %v24 = vld [vmem:[%s1 + $0x1c] sm:$0xf]
  %v25 = vld [vmem:[%s1 + $0x20] sm:$0xf]
  %v26 = vld [vmem:[%s1 + $0x24] sm:$0xf]
  %v27 = vld [vmem:[%s1 + $0x28] sm:$0xf]
  %v28 = vld [vmem:[%s1 + $0x2c] sm:$0xf]
  %v29 = vld [vmem:[%s1 + $0x30] sm:$0xf]
  %v30 = vld [vmem:[%s1 + $0x34] sm:$0xf]
  %v31 = vld [vmem:[%s1 + $0x38] sm:$0xf]
  %v32 = vld [vmem:[%s1 + $0x3c] sm:$0xf]
  %v33 = vld [vmem:[%s1 + $0x40] sm:$0xf]
  %v34 = vld [vmem:[%s1 + $0x44] sm:$0xf]
  %v35 = vld [vmem:[%s1 + $0x48] sm:$0xf]
  %v36 = vld [vmem:[%s1 + $0x4c] sm:$0xf]
  %v37 = vld [vmem:[%s1 + $0x50] sm:$0xf]
  %v38 = vld [vmem:[%s1 + $0x54] sm:$0xf]
  %v39 = vld [vmem:[%s1 + $0x58] sm:$0xf]
  %v40 = vld [vmem:[%s1 + $0x5c] sm:$0xf]
  %v41 = vpack.c.bf16 %v15, %v15
  %v42 = vpack.c.bf16 %v16, %v16
  %v43 = vld [vmem:[%s2] sm:$0x1]
  %v45 = vperm.slane %v43, 0
  %v71 = vunpack.c.l.b16 %v17
  %v72 = vunpack.c.l.b16 %v18
  %v73 = vunpack.c.l.b16 %v19
  %v74 = vunpack.c.l.b16 %v20
  %v75 = vunpack.c.l.b16 %v21
  %v76 = vunpack.c.l.b16 %v22
  %v77 = vunpack.c.l.b16 %v23
  %v78 = vunpack.c.l.b16 %v24
  %v79 = vunpack.c.l.b16 %v25
  %v80 = vunpack.c.l.b16 %v26
  %v81 = vunpack.c.l.b16 %v27
  %v82 = vunpack.c.l.b16 %v28
  %v83 = vunpack.c.l.b16 %v29
  %v84 = vunpack.c.l.b16 %v30
  %v85 = vunpack.c.l.b16 %v31
  %v86 = vunpack.c.l.b16 %v32
  %v87 = vunpack.c.l.b16 %v33
  %v88 = vunpack.c.l.b16 %v34
  %v89 = vunpack.c.l.b16 %v35
  %v90 = vunpack.c.l.b16 %v36
  %v91 = vunpack.c.l.b16 %v37
  %v92 = vunpack.c.l.b16 %v38
  %v93 = vunpack.c.l.b16 %v39
  %v94 = vunpack.c.l.b16 %v40
  %v95 = vpack.c.b16 %v72, %v71
  %v96 = vpack.c.b16 %v74, %v73
  %v97 = vpack.c.b16 %v76, %v75
  %v98 = vpack.c.b16 %v78, %v77
  %v99 = vpack.c.b16 %v80, %v79
  %v100 = vpack.c.b16 %v82, %v81
  %v101 = vpack.c.b16 %v84, %v83
  %v102 = vpack.c.b16 %v86, %v85
  %v103 = vpack.c.b16 %v88, %v87
  %v104 = vpack.c.b16 %v90, %v89
  %v105 = vpack.c.b16 %v92, %v91
  %v106 = vpack.c.b16 %v94, %v93
  %vm119 = vcmask 523264
  %v121 = vsel %vm119, %v42, 0
  %123 = vmatpush.bf16.msra.mxu0 %v102
  %124 = vmatpush.bf16.msra.mxu0 %v101
  %125 = vmatpush.bf16.msra.mxu0 %v100
  %126 = vmatpush.bf16.msra.mxu0 %v99
  %127 = vmatpush.bf16.msra.mxu0 %v98
  %128 = vmatpush.bf16.msra.mxu0 %v97
  %129 = vmatpush.bf16.msra.mxu0 %v96
  %130 = vmatpush.bf16.msra.mxu0 %v95
  %131 = vmatmul.bf16.gmra.mxu0 %v41
  %v132 = vpop.f32.mrf.mxu0
  %v133 = vadd.f32 %v45, %v132
  %v134 = vpop.f32.mrf.mxu0
  %135 = vdwg.mxu0
  %136 = vmatpush.bf16.msra.mxu0 0
  %137 = vmatpush.bf16.msra.mxu0 0
  %138 = vmatpush.bf16.msra.mxu0 0
  %139 = vmatpush.bf16.msra.mxu0 0
  %140 = vmatpush.bf16.msra.mxu0 %v106
  %141 = vmatpush.bf16.msra.mxu0 %v105
  %142 = vmatpush.bf16.msra.mxu0 %v104
  %143 = vmatpush.bf16.msra.mxu0 %v103
  %144 = vmatmul.bf16.gmra.mxu0 %v121
  %v145 = vpop.f32.mrf.mxu0
  %v146 = vadd.f32 %v133, %v145
  %v147 = vpop.f32.mrf.mxu0
  %148 = vdwg.mxu0
  %vm149 = vcmask 261120
  %150 = vst.msk [vmem:[%s3] sm:$0xff] %vm149, %v146
  // Predicated region
  $region14: #{vit_classify_forward.4} parent=0 // pred_check
    _
  $region15: #{vit_classify_forward.4} parent=0 // pred_check_branch
    %152 = sbr.rel (0) target = $region17
  $region16: #{vit_classify_forward.4} parent=0 // pred_region
    _
  $region17: #{vit_classify_forward.4} parent=0 // pred_fallthru
    _
  // Predicated region
  $region18: #{vit_classify_forward.4} parent=0 // pred_check
    _
  $region19: #{vit_classify_forward.4} parent=0 // pred_check_branch
    %154 = sbr.rel (0) target = $region21
  $region20: #{vit_classify_forward.4} parent=0 // pred_region
    _
  $region21: #{vit_classify_forward.4} parent=0 // pred_fallthru
    _

// kernel: vit_classify_forward.7
$region0: #{vit_classify_forward.7}
  #allocation0 [shape = 'u32[]', space=smem, size = 0x4, offset = 0x4, fixed_abs, tag = 'smem constant byte address 0x4 - core index']
  #allocation1 [shape = 'u32[72,128]{1,0:T(1,128)}', space=vmem, size = 0x9000, scoped, tag = 'internal scratch']
  %s0 = inlined_call_operand.vmem [shape: f32[10,32], index: 0, kind: input, shape index: {}]
  %s1 = inlined_call_operand.vmem [shape: f32[1,32], index: 1, kind: input, shape index: {}]
  %s2 = inlined_call_operand.vmem [shape: f32[1,32], index: 2, kind: input, shape index: {}]
  %s3 = inlined_call_operand.vmem [shape: f32[10,32], index: 3, kind: output, shape index: {}]
  %s4 = sld [smem:[#allocation0]]
  $region22: #{vit_classify_forward.7} parent=0
    _
  %s6 = ssub.s32 1, %s4
  %s7 = scalar_select 0, %s6, %s4
  // Predicated region
  $region2: #{vit_classify_forward.7} parent=0 // pred_check
    _
  $region3: #{vit_classify_forward.7} parent=0 // pred_check_branch
    %9 = sbr.rel (0) target = $region5
  $region4: #{vit_classify_forward.7} parent=0 // pred_region
    _
  $region5: #{vit_classify_forward.7} parent=0 // pred_fallthru
    _
  // Predicated region
  $region6: #{vit_classify_forward.7} parent=0 // pred_check
    _
  $region7: #{vit_classify_forward.7} parent=0 // pred_check_branch
    %11 = sbr.rel (0) target = $region9
  $region8: #{vit_classify_forward.7} parent=0 // pred_region
    _
  $region9: #{vit_classify_forward.7} parent=0 // pred_fallthru
    _
  // Predicated region
  $region10: #{vit_classify_forward.7} parent=0 // pred_check
    _
  $region11: #{vit_classify_forward.7} parent=0 // pred_check_branch
    %13 = sbr.rel (0) target = $region13
  $region12: #{vit_classify_forward.7} parent=0 // pred_region
    _
  $region13: #{vit_classify_forward.7} parent=0 // pred_fallthru
    _
  %v14 = vld [vmem:[%s0] sm:$0xff]
  %v15 = vld [vmem:[%s0 + $0x8] sm:$0x3]
  %v16 = vld [vmem:[%s1] sm:$0x1]
  %v17 = vld [vmem:[%s2] sm:$0x1]
  %vm18 = vcmask 261120
  %v19 = vsel %vm18, %v14, 0.0
  %20 = vadd.xlane.f32.xlu0 %v19
  %v21 = vpop.xlane.xlu0 %20
  %vm22 = vcmask 254976
  %v23 = vsel %vm22, %v15, 0.0
  %24 = vadd.xlane.f32.xlu0 %v23
  %v25 = vpop.xlane.xlu0 %24
  %v26 = vrcp.pop 32.0
  %v27 = vmul.f32 32.0, %v26
  %v28 = vsub.f32 1.0, %v27
  %v29 = vmul.f32 %v26, %v28
  %v30 = vadd.f32 %v26, %v29
  %vm31 = vweird.f32 %v26
  %v32 = vsel %vm31, %v26, %v30
  %v33 = vmul.f32 %v21, %v32
  %v34 = vmul.f32 %v25, %v32
  %v35 = vsub.f32 %v14, %v33
  %v36 = vsub.f32 %v15, %v34
  %v37 = vmul.f32 %v35, %v35
  %v38 = vmul.f32 %v36, %v36
  %v39 = vsel %vm18, %v37, 0.0
  %40 = vadd.xlane.f32.xlu0 %v39
  %v41 = vpop.xlane.xlu0 %40
  %v42 = vsel %vm22, %v38, 0.0
  %43 = vadd.xlane.f32.xlu0 %v42
  %v44 = vpop.xlane.xlu0 %43
  %v45 = vmul.f32 %v41, %v32
  %v46 = vmul.f32 %v44, %v32
  %v47 = vadd.f32 %v45, 1e-12
  %v48 = vadd.f32 %v46, 1e-12
  %v49 = vrsqrt.pop %v47
  %v50 = vmul.f32 %v49, %v47
  %v51 = vmul.f32 %v50, %v49
  %v52 = vmul.f32 0.5, %v51
  %v53 = vsub.f32 1.5, %v52
  %v54 = vmul.f32 %v49, %v53
  %vm55 = vweird.f32 %v47
  %vm56 = vweird.f32 %v49
  %vm57 = vmor %vm55, %vm56
  %v58 = vsel %vm57, %v49, %v54
  %v59 = vrsqrt.pop %v48
  %v60 = vmul.f32 %v59, %v48
  %v61 = vmul.f32 %v60, %v59
  %v62 = vmul.f32 0.5, %v61
  %v63 = vsub.f32 1.5, %v62
  %v64 = vmul.f32 %v59, %v63
  %vm65 = vweird.f32 %v48
  %vm66 = vweird.f32 %v59
  %vm67 = vmor %vm65, %vm66
  %v68 = vsel %vm67, %v59, %v64
  %v69 = vmul.f32 %v35, %v58
  %v70 = vmul.f32 %v36, %v68
  %v72 = vperm.slane %v16, 0
  %v74 = vmul.f32 %v69, %v72
  %v75 = vmul.f32 %v70, %v72
  %v77 = vperm.slane %v17, 0
  %v79 = vadd.f32 %v74, %v77
  %v80 = vadd.f32 %v75, %v77
  %81 = vst.msk [vmem:[%s3] sm:$0xff] %vm18, %v79
  %82 = vst.msk [vmem:[%s3 + $0x8] sm:$0x3] %vm22, %v80
  // Predicated region
  $region14: #{vit_classify_forward.7} parent=0 // pred_check
    _
  $region15: #{vit_classify_forward.7} parent=0 // pred_check_branch
    %84 = sbr.rel (0) target = $region17
  $region16: #{vit_classify_forward.7} parent=0 // pred_region
    _
  $region17: #{vit_classify_forward.7} parent=0 // pred_fallthru
    _
  // Predicated region
  $region18: #{vit_classify_forward.7} parent=0 // pred_check
    _
  $region19: #{vit_classify_forward.7} parent=0 // pred_check_branch
    %86 = sbr.rel (0) target = $region21
  $region20: #{vit_classify_forward.7} parent=0 // pred_region
    _
  $region21: #{vit_classify_forward.7} parent=0 // pred_fallthru
    _

// kernel: vit_classify_forward.5
$region0: #{vit_classify_forward.5}
  #allocation0 [shape = 'u32[]', space=smem, size = 0x4, offset = 0x4, fixed_abs, tag = 'smem constant byte address 0x4 - core index']
  #allocation1 [shape = 'u32[72,128]{1,0:T(1,128)}', space=vmem, size = 0x9000, scoped, tag = 'internal scratch']
  %s0 = inlined_call_operand.vmem [shape: f32[2,5,32], index: 0, kind: input, shape index: {}]
  %s1 = inlined_call_operand.vmem [shape: f32[1,32], index: 1, kind: input, shape index: {}]
  %s2 = inlined_call_operand.vmem [shape: f32[1,32], index: 2, kind: input, shape index: {}]
  %s3 = inlined_call_operand.vmem [shape: bf16[32,96], index: 3, kind: input, shape index: {}]
  %s4 = inlined_call_operand.vmem [shape: f32[1,96], index: 4, kind: input, shape index: {}]
  %s5 = inlined_call_operand.vmem [shape: bf16[32,32], index: 5, kind: input, shape index: {}]
  %s6 = inlined_call_operand.vmem [shape: f32[1,32], index: 6, kind: input, shape index: {}]
  %s7 = inlined_call_operand.vmem [shape: f32[1,32], index: 7, kind: input, shape index: {}]
  %s8 = inlined_call_operand.vmem [shape: f32[1,32], index: 8, kind: input, shape index: {}]
  %s9 = inlined_call_operand.vmem [shape: bf16[32,64], index: 9, kind: input, shape index: {}]
  %s10 = inlined_call_operand.vmem [shape: f32[1,64], index: 10, kind: input, shape index: {}]
  %s11 = inlined_call_operand.vmem [shape: bf16[64,32], index: 11, kind: input, shape index: {}]
  %s12 = inlined_call_operand.vmem [shape: f32[1,32], index: 12, kind: input, shape index: {}]
  %s13 = inlined_call_operand.vmem [shape: f32[2,5,32], index: 13, kind: output, shape index: {0}]
  %s14 = inlined_call_operand.vmem [shape: f32[2,4,5,5], index: 14, kind: output, shape index: {1}]
  %15 = xla_tuple %s13, %s14
  %s16 = sld [smem:[#allocation0]]
  $region93: #{vit_classify_forward.5} parent=0
    _
  %s18 = ssub.s32 1, %s16
  %s19 = scalar_select 0, %s18, %s16
  loop: start=0, step=1, limit=4
  $region2: #{vit_classify_forward.5} parent=0 // loop_pre_header
    _
  $region3: #{vit_classify_forward.5} parent=0 // loop_header
    %s21 = sphi 0, %s25
    %p22 = scmp.ge.s32.totalorder %s21, 4
    %s31 = sphi 0, %s33
    %s34 = sphi 0, %s31
    %s35 = sphi 0, %s34
    %s51 = sphi 0, %s35
    %s55 = sphi 0, %s55
    %s57 = sphi 0, %s55
    %s58 = sphi 0, %s57
    %s72 = sphi 0, %s58
    %s76 = sphi 0, %s76
    %s78 = sphi 0, %s76
    %s79 = sphi 0, %s78
    %s93 = sphi 0, %s79
    %s97 = sphi 0, %s97
    %s99 = sphi 0, %s97
    %s100 = sphi 0, %s99
    %s114 = sphi 0, %s100
    %s118 = sphi 0, %s118
    %s120 = sphi 0, %s118
    %s121 = sphi 0, %s120
    %s135 = sphi 0, %s121
    %s139 = sphi 0, %s139
    %s141 = sphi 0, %s139
    %s142 = sphi 0, %s141
    %s156 = sphi 0, %s142
    %s160 = sphi 0, %s160
    %s162 = sphi 0, %s160
    %s163 = sphi 0, %s162
    %s177 = sphi 0, %s163
    %s181 = sphi 0, %s181
    %s183 = sphi 0, %s181
    %s184 = sphi 0, %s183
    %s198 = sphi 0, %s184
    %s202 = sphi 0, %s202
    %s204 = sphi 0, %s202
    %s205 = sphi 0, %s204
    %s219 = sphi 0, %s205
    %s223 = sphi 0, %s223
    %s225 = sphi 0, %s223
    %s226 = sphi 0, %s225
    %s240 = sphi 0, %s226
    %s244 = sphi 0, %s244
    %s246 = sphi 0, %s244
    %s247 = sphi 0, %s246
    %s261 = sphi 0, %s247
    %s265 = sphi 0, %s265
    %s267 = sphi 0, %s265
    %s268 = sphi 0, %s267
    %s282 = sphi 0, %s268
    %s286 = sphi 0, %s286
    %s288 = sphi 0, %s286
    %s289 = sphi 0, %s288
    %s303 = sphi 0, %s289
    %s309 = sphi 0, %s311
    %s312 = sphi 0, %s309
    %s313 = sphi 0, %s312
    %s329 = sphi 0, %s313
    %s335 = sphi 0, %s337
    %s338 = sphi 0, %s335
    %s339 = sphi 0, %s338
    %s355 = sphi 0, %s339
  $region4: #{vit_classify_forward.5} parent=0 // loop_header_branch
    %24 = sbr.rel (%p22) target = $region8
  $region5: #{vit_classify_forward.5} parent=0 // loop_body
    %s26 = ssub.s32 %s21, 1
    %s27 = ssub.s32 %s21, 2
    %s28 = sadd.s32 %s21, 1
    %s29 = ssub.s32 %s21, %s28
    %p30 = scmp.eq.s32.totalorder %s29, 0
    %s32 = sadd.s32 %s31, 1
    %s33 = scalar_select %p30, %s31, %s32
    %p36 = pneg %p30
    %p37 = scmp.eq.s32.totalorder %s21, 1
    %p38 = por %p36, %p37
    %p39 = scmp.ne.s32.totalorder %s31, %s34
    %p40 = scmp.eq.s32.totalorder %s21, 0
    %p41 = por %p39, %p40
    %p42 = scmp.ne.s32.totalorder %s31, %s34
    %p43 = scmp.eq.s32.totalorder %s26, 1
    %p44 = por %p42, %p43
    %p45 = scmp.ne.s32.totalorder %s34, %s35
    %p46 = scmp.eq.s32.totalorder %s26, 0
    %p47 = por %p45, %p46
    %p48 = scmp.ne.s32.totalorder %s34, %s35
    %p49 = scmp.eq.s32.totalorder %s27, 1
    %p50 = por %p48, %p49
    %p52 = scmp.ne.s32.totalorder %s35, %s51
    %p53 = scmp.eq.s32.totalorder %s27, 0
    %p54 = por %p52, %p53
    %s56 = sadd.s32 %s55, 1
    %p59 = scmp.eq.s32.totalorder %s21, 1
    %p60 = scmp.ne.s32.totalorder %s55, %s57
    %p61 = scmp.eq.s32.totalorder %s21, 0
    %p62 = por %p60, %p61
    %p63 = scmp.ne.s32.totalorder %s55, %s57
    %p64 = scmp.eq.s32.totalorder %s26, 1
    %p65 = por %p63, %p64
    %p66 = scmp.ne.s32.totalorder %s57, %s58
    %p67 = scmp.eq.s32.totalorder %s26, 0
    %p68 = por %p66, %p67
    %p69 = scmp.ne.s32.totalorder %s57, %s58
    %p70 = scmp.eq.s32.totalorder %s27, 1
    %p71 = por %p69, %p70
    %p73 = scmp.ne.s32.totalorder %s58, %s72
    %p74 = scmp.eq.s32.totalorder %s27, 0
    %p75 = por %p73, %p74
    %s77 = sadd.s32 %s76, 1
    %p80 = scmp.eq.s32.totalorder %s21, 1
    %p81 = scmp.ne.s32.totalorder %s76, %s78
    %p82 = scmp.eq.s32.totalorder %s21, 0
    %p83 = por %p81, %p82
    %p84 = scmp.ne.s32.totalorder %s76, %s78
    %p85 = scmp.eq.s32.totalorder %s26, 1
    %p86 = por %p84, %p85
    %p87 = scmp.ne.s32.totalorder %s78, %s79
    %p88 = scmp.eq.s32.totalorder %s26, 0
    %p89 = por %p87, %p88
    %p90 = scmp.ne.s32.totalorder %s78, %s79
    %p91 = scmp.eq.s32.totalorder %s27, 1
    %p92 = por %p90, %p91
    %p94 = scmp.ne.s32.totalorder %s79, %s93
    %p95 = scmp.eq.s32.totalorder %s27, 0
    %p96 = por %p94, %p95
    %s98 = sadd.s32 %s97, 1
    %p101 = scmp.eq.s32.totalorder %s21, 1
    %p102 = scmp.ne.s32.totalorder %s97, %s99
    %p103 = scmp.eq.s32.totalorder %s21, 0
    %p104 = por %p102, %p103
    %p105 = scmp.ne.s32.totalorder %s97, %s99
    %p106 = scmp.eq.s32.totalorder %s26, 1
    %p107 = por %p105, %p106
    %p108 = scmp.ne.s32.totalorder %s99, %s100
    %p109 = scmp.eq.s32.totalorder %s26, 0
    %p110 = por %p108, %p109
    %p111 = scmp.ne.s32.totalorder %s99, %s100
    %p112 = scmp.eq.s32.totalorder %s27, 1
    %p113 = por %p111, %p112
    %p115 = scmp.ne.s32.totalorder %s100, %s114
    %p116 = scmp.eq.s32.totalorder %s27, 0
    %p117 = por %p115, %p116
    %s119 = sadd.s32 %s118, 1
    %p122 = scmp.eq.s32.totalorder %s21, 1
    %p123 = scmp.ne.s32.totalorder %s118, %s120
    %p124 = scmp.eq.s32.totalorder %s21, 0
    %p125 = por %p123, %p124
    %p126 = scmp.ne.s32.totalorder %s118, %s120
    %p127 = scmp.eq.s32.totalorder %s26, 1
    %p128 = por %p126, %p127
    %p129 = scmp.ne.s32.totalorder %s120, %s121
    %p130 = scmp.eq.s32.totalorder %s26, 0
    %p131 = por %p129, %p130
    %p132 = scmp.ne.s32.totalorder %s120, %s121
    %p133 = scmp.eq.s32.totalorder %s27, 1
    %p134 = por %p132, %p133
    %p136 = scmp.ne.s32.totalorder %s121, %s135
    %p137 = scmp.eq.s32.totalorder %s27, 0
    %p138 = por %p136, %p137
    %s140 = sadd.s32 %s139, 1
    %p143 = scmp.eq.s32.totalorder %s21, 1
    %p144 = scmp.ne.s32.totalorder %s139, %s141
    %p145 = scmp.eq.s32.totalorder %s21, 0
    %p146 = por %p144, %p145
    %p147 = scmp.ne.s32.totalorder %s139, %s141
    %p148 = scmp.eq.s32.totalorder %s26, 1
    %p149 = por %p147, %p148
    %p150 = scmp.ne.s32.totalorder %s141, %s142
    %p151 = scmp.eq.s32.totalorder %s26, 0
    %p152 = por %p150, %p151
    %p153 = scmp.ne.s32.totalorder %s141, %s142
    %p154 = scmp.eq.s32.totalorder %s27, 1
    %p155 = por %p153, %p154
    %p157 = scmp.ne.s32.totalorder %s142, %s156
    %p158 = scmp.eq.s32.totalorder %s27, 0
    %p159 = por %p157, %p158
    %s161 = sadd.s32 %s160, 1
    %p164 = scmp.eq.s32.totalorder %s21, 1
    %p165 = scmp.ne.s32.totalorder %s160, %s162
    %p166 = scmp.eq.s32.totalorder %s21, 0
    %p167 = por %p165, %p166
    %p168 = scmp.ne.s32.totalorder %s160, %s162
    %p169 = scmp.eq.s32.totalorder %s26, 1
    %p170 = por %p168, %p169
    %p171 = scmp.ne.s32.totalorder %s162, %s163
    %p172 = scmp.eq.s32.totalorder %s26, 0
    %p173 = por %p171, %p172
    %p174 = scmp.ne.s32.totalorder %s162, %s163
    %p175 = scmp.eq.s32.totalorder %s27, 1
    %p176 = por %p174, %p175
    %p178 = scmp.ne.s32.totalorder %s163, %s177
    %p179 = scmp.eq.s32.totalorder %s27, 0
    %p180 = por %p178, %p179
    %s182 = sadd.s32 %s181, 1
    %p185 = scmp.eq.s32.totalorder %s21, 1
    %p186 = scmp.ne.s32.totalorder %s181, %s183
    %p187 = scmp.eq.s32.totalorder %s21, 0
    %p188 = por %p186, %p187
    %p189 = scmp.ne.s32.totalorder %s181, %s183
    %p190 = scmp.eq.s32.totalorder %s26, 1
    %p191 = por %p189, %p190
    %p192 = scmp.ne.s32.totalorder %s183, %s184
    %p193 = scmp.eq.s32.totalorder %s26, 0
    %p194 = por %p192, %p193
    %p195 = scmp.ne.s32.totalorder %s183, %s184
    %p196 = scmp.eq.s32.totalorder %s27, 1
    %p197 = por %p195, %p196
    %p199 = scmp.ne.s32.totalorder %s184, %s198
    %p200 = scmp.eq.s32.totalorder %s27, 0
    %p201 = por %p199, %p200
    %s203 = sadd.s32 %s202, 1
    %p206 = scmp.eq.s32.totalorder %s21, 1
    %p207 = scmp.ne.s32.totalorder %s202, %s204
    %p208 = scmp.eq.s32.totalorder %s21, 0
    %p209 = por %p207, %p208
    %p210 = scmp.ne.s32.totalorder %s202, %s204
    %p211 = scmp.eq.s32.totalorder %s26, 1
    %p212 = por %p210, %p211
    %p213 = scmp.ne.s32.totalorder %s204, %s205
    %p214 = scmp.eq.s32.totalorder %s26, 0
    %p215 = por %p213, %p214
    %p216 = scmp.ne.s32.totalorder %s204, %s205
    %p217 = scmp.eq.s32.totalorder %s27, 1
    %p218 = por %p216, %p217
    %p220 = scmp.ne.s32.totalorder %s205, %s219
    %p221 = scmp.eq.s32.totalorder %s27, 0
    %p222 = por %p220, %p221
    %s224 = sadd.s32 %s223, 1
    %p227 = scmp.eq.s32.totalorder %s21, 1
    %p228 = scmp.ne.s32.totalorder %s223, %s225
    %p229 = scmp.eq.s32.totalorder %s21, 0
    %p230 = por %p228, %p229
    %p231 = scmp.ne.s32.totalorder %s223, %s225
    %p232 = scmp.eq.s32.totalorder %s26, 1
    %p233 = por %p231, %p232
    %p234 = scmp.ne.s32.totalorder %s225, %s226
    %p235 = scmp.eq.s32.totalorder %s26, 0
    %p236 = por %p234, %p235
    %p237 = scmp.ne.s32.totalorder %s225, %s226
    %p238 = scmp.eq.s32.totalorder %s27, 1
    %p239 = por %p237, %p238
    %p241 = scmp.ne.s32.totalorder %s226, %s240
    %p242 = scmp.eq.s32.totalorder %s27, 0
    %p243 = por %p241, %p242
    %s245 = sadd.s32 %s244, 1
    %p248 = scmp.eq.s32.totalorder %s21, 1
    %p249 = scmp.ne.s32.totalorder %s244, %s246
    %p250 = scmp.eq.s32.totalorder %s21, 0
    %p251 = por %p249, %p250
    %p252 = scmp.ne.s32.totalorder %s244, %s246
    %p253 = scmp.eq.s32.totalorder %s26, 1
    %p254 = por %p252, %p253
    %p255 = scmp.ne.s32.totalorder %s246, %s247
    %p256 = scmp.eq.s32.totalorder %s26, 0
    %p257 = por %p255, %p256
    %p258 = scmp.ne.s32.totalorder %s246, %s247
    %p259 = scmp.eq.s32.totalorder %s27, 1
    %p260 = por %p258, %p259
    %p262 = scmp.ne.s32.totalorder %s247, %s261
    %p263 = scmp.eq.s32.totalorder %s27, 0
    %p264 = por %p262, %p263
    %s266 = sadd.s32 %s265, 1
    %p269 = scmp.eq.s32.totalorder %s21, 1
    %p270 = scmp.ne.s32.totalorder %s265, %s267
    %p271 = scmp.eq.s32.totalorder %s21, 0
    %p272 = por %p270, %p271
    %p273 = scmp.ne.s32.totalorder %s265, %s267
    %p274 = scmp.eq.s32.totalorder %s26, 1
    %p275 = por %p273, %p274
    %p276 = scmp.ne.s32.totalorder %s267, %s268
    %p277 = scmp.eq.s32.totalorder %s26, 0
    %p278 = por %p276, %p277
    %p279 = scmp.ne.s32.totalorder %s267, %s268
    %p280 = scmp.eq.s32.totalorder %s27, 1
    %p281 = por %p279, %p280
    %p283 = scmp.ne.s32.totalorder %s268, %s282
    %p284 = scmp.eq.s32.totalorder %s27, 0
    %p285 = por %p283, %p284
    %s287 = sadd.s32 %s286, 1
    %p290 = scmp.eq.s32.totalorder %s21, 1
    %p291 = scmp.ne.s32.totalorder %s286, %s288
    %p292 = scmp.eq.s32.totalorder %s21, 0
    %p293 = por %p291, %p292
    %p294 = scmp.ne.s32.totalorder %s286, %s288
    %p295 = scmp.eq.s32.totalorder %s26, 1
    %p296 = por %p294, %p295
    %p297 = scmp.ne.s32.totalorder %s288, %s289
    %p298 = scmp.eq.s32.totalorder %s26, 0
    %p299 = por %p297, %p298
    %p300 = scmp.ne.s32.totalorder %s288, %s289
    %p301 = scmp.eq.s32.totalorder %s27, 1
    %p302 = por %p300, %p301
    %p304 = scmp.ne.s32.totalorder %s289, %s303
    %p305 = scmp.eq.s32.totalorder %s27, 0
    %p306 = por %p304, %p305
    %s307 = ssub.s32 %s21, %s28
    %p308 = scmp.eq.s32.totalorder %s307, 0
    %s310 = sadd.s32 %s309, 1
    %s311 = scalar_select %p308, %s309, %s310
    %p314 = pneg %p308
    %p315 = scmp.eq.s32.totalorder %s21, 1
    %p316 = por %p314, %p315
    %p317 = scmp.ne.s32.totalorder %s309, %s312
    %p318 = scmp.eq.s32.totalorder %s21, 0
    %p319 = por %p317, %p318
    %p320 = scmp.ne.s32.totalorder %s309, %s312
    %p321 = scmp.eq.s32.totalorder %s26, 1
    %p322 = por %p320, %p321
    %p323 = scmp.ne.s32.totalorder %s312, %s313
    %p324 = scmp.eq.s32.totalorder %s26, 0
    %p325 = por %p323, %p324
    %p326 = scmp.ne.s32.totalorder %s312, %s313
    %p327 = scmp.eq.s32.totalorder %s27, 1
    %p328 = por %p326, %p327
    %p330 = scmp.ne.s32.totalorder %s313, %s329
    %p331 = scmp.eq.s32.totalorder %s27, 0
    %p332 = por %p330, %p331
    %s333 = ssub.s32 %s21, %s28
    %p334 = scmp.eq.s32.totalorder %s333, 0
    %s336 = sadd.s32 %s335, 1
    %s337 = scalar_select %p334, %s335, %s336
    %p340 = pneg %p334
    %p341 = scmp.eq.s32.totalorder %s21, 1
    %p342 = por %p340, %p341
    %p343 = scmp.ne.s32.totalorder %s335, %s338
    %p344 = scmp.eq.s32.totalorder %s21, 0
    %p345 = por %p343, %p344
    %p346 = scmp.ne.s32.totalorder %s335, %s338
    %p347 = scmp.eq.s32.totalorder %s26, 1
    %p348 = por %p346, %p347
    %p349 = scmp.ne.s32.totalorder %s338, %s339
    %p350 = scmp.eq.s32.totalorder %s26, 0
    %p351 = por %p349, %p350
    %p352 = scmp.ne.s32.totalorder %s338, %s339
    %p353 = scmp.eq.s32.totalorder %s27, 1
    %p354 = por %p352, %p353
    %p356 = scmp.ne.s32.totalorder %s339, %s355
    %p357 = scmp.eq.s32.totalorder %s27, 0
    %p358 = por %p356, %p357
    %p359 = scmp.le.s32.totalorder 1, %s21
    %p360 = scmp.lt.s32.totalorder %s21, 3
    %p361 = pnand %p359, %p360
    %p362 = pneg %p361
    // Predicated region
    $region9: #{vit_classify_forward.5} parent=5 // pred_check
      _
    $region10: #{vit_classify_forward.5} parent=5 // pred_check_branch
      %364 = sbr.rel (%p361) target = $region12
    $region11: #{vit_classify_forward.5} parent=5 // pred_region
      %s365 = ssub.s32 %s21, 1
      // Predicated region
      $region13: #{vit_classify_forward.5} parent=11 // pred_check
        %p366 = pneg %p68
      $region14: #{vit_classify_forward.5} parent=11 // pred_check_branch
        %368 = sbr.rel (%p366) target = $region16
      $region15: #{vit_classify_forward.5} parent=11 // pred_region
        _
      $region16: #{vit_classify_forward.5} parent=11 // pred_fallthru
        _
      // Predicated region
      $region17: #{vit_classify_forward.5} parent=11 // pred_check
        %p369 = pneg %p89
      $region18: #{vit_classify_forward.5} parent=11 // pred_check_branch
        %371 = sbr.rel (%p369) target = $region20
      $region19: #{vit_classify_forward.5} parent=11 // pred_region
        _
      $region20: #{vit_classify_forward.5} parent=11 // pred_fallthru
        _
      // Predicated region
      $region21: #{vit_classify_forward.5} parent=11 // pred_check
        %p372 = pneg %p110
      $region22: #{vit_classify_forward.5} parent=11 // pred_check_branch
        %374 = sbr.rel (%p372) target = $region24
      $region23: #{vit_classify_forward.5} parent=11 // pred_region
        _
      $region24: #{vit_classify_forward.5} parent=11 // pred_fallthru
        _
      // Predicated region
      $region25: #{vit_classify_forward.5} parent=11 // pred_check
        %p375 = pneg %p131
      $region26: #{vit_classify_forward.5} parent=11 // pred_check_branch
        %377 = sbr.rel (%p375) target = $region28
      $region27: #{vit_classify_forward.5} parent=11 // pred_region
        _
      $region28: #{vit_classify_forward.5} parent=11 // pred_fallthru
        _
      // Predicated region
      $region29: #{vit_classify_forward.5} parent=11 // pred_check
        %p378 = pneg %p152
      $region30: #{vit_classify_forward.5} parent=11 // pred_check_branch
        %380 = sbr.rel (%p378) target = $region32
      $region31: #{vit_classify_forward.5} parent=11 // pred_region
        _
      $region32: #{vit_classify_forward.5} parent=11 // pred_fallthru
        _
      // Predicated region
      $region33: #{vit_classify_forward.5} parent=11 // pred_check
        %p381 = pneg %p173
      $region34: #{vit_classify_forward.5} parent=11 // pred_check_branch
        %383 = sbr.rel (%p381) target = $region36
      $region35: #{vit_classify_forward.5} parent=11 // pred_region
        _
      $region36: #{vit_classify_forward.5} parent=11 // pred_fallthru
        _
      // Predicated region
      $region37: #{vit_classify_forward.5} parent=11 // pred_check
        %p384 = pneg %p194
      $region38: #{vit_classify_forward.5} parent=11 // pred_check_branch
        %386 = sbr.rel (%p384) target = $region40
      $region39: #{vit_classify_forward.5} parent=11 // pred_region
        _
      $region40: #{vit_classify_forward.5} parent=11 // pred_fallthru
        _
      // Predicated region
      $region41: #{vit_classify_forward.5} parent=11 // pred_check
        %p387 = pneg %p215
      $region42: #{vit_classify_forward.5} parent=11 // pred_check_branch
        %389 = sbr.rel (%p387) target = $region44
      $region43: #{vit_classify_forward.5} parent=11 // pred_region
        _
      $region44: #{vit_classify_forward.5} parent=11 // pred_fallthru
        _
      // Predicated region
      $region45: #{vit_classify_forward.5} parent=11 // pred_check
        %p390 = pneg %p236
      $region46: #{vit_classify_forward.5} parent=11 // pred_check_branch
        %392 = sbr.rel (%p390) target = $region48
      $region47: #{vit_classify_forward.5} parent=11 // pred_region
        _
      $region48: #{vit_classify_forward.5} parent=11 // pred_fallthru
        _
      // Predicated region
      $region49: #{vit_classify_forward.5} parent=11 // pred_check
        %p393 = pneg %p257
      $region50: #{vit_classify_forward.5} parent=11 // pred_check_branch
        %395 = sbr.rel (%p393) target = $region52
      $region51: #{vit_classify_forward.5} parent=11 // pred_region
        _
      $region52: #{vit_classify_forward.5} parent=11 // pred_fallthru
        _
      // Predicated region
      $region53: #{vit_classify_forward.5} parent=11 // pred_check
        %p396 = pneg %p278
      $region54: #{vit_classify_forward.5} parent=11 // pred_check_branch
        %398 = sbr.rel (%p396) target = $region56
      $region55: #{vit_classify_forward.5} parent=11 // pred_region
        _
      $region56: #{vit_classify_forward.5} parent=11 // pred_fallthru
        _
      // Predicated region
      $region57: #{vit_classify_forward.5} parent=11 // pred_check
        %p399 = pneg %p299
      $region58: #{vit_classify_forward.5} parent=11 // pred_check_branch
        %401 = sbr.rel (%p399) target = $region60
      $region59: #{vit_classify_forward.5} parent=11 // pred_region
        _
      $region60: #{vit_classify_forward.5} parent=11 // pred_fallthru
        _
    $region12: #{vit_classify_forward.5} parent=5 // pred_fallthru
      _
    %p402 = scmp.lt.s32.totalorder %s21, 2
    // Predicated region
    $region61: #{vit_classify_forward.5} parent=5 // pred_check
      %p403 = pneg %p402
    $region62: #{vit_classify_forward.5} parent=5 // pred_check_branch
      %405 = sbr.rel (%p403) target = $region64
    $region63: #{vit_classify_forward.5} parent=5 // pred_region
      // Predicated region
      $region65: #{vit_classify_forward.5} parent=63 // pred_check
        %p406 = pneg %p41
      $region66: #{vit_classify_forward.5} parent=63 // pred_check_branch
        %408 = sbr.rel (%p406) target = $region68
      $region67: #{vit_classify_forward.5} parent=63 // pred_region
        %p409 = scmp.lt.s32.totalorder %s21, 1
        %s410 = scalar_select %p409, %s21, 1
        %s411 = smul.addr %s410, 8
        %s412 = scalar_lea.vmem %s0, %s411
      $region68: #{vit_classify_forward.5} parent=63 // pred_fallthru
        _
    $region64: #{vit_classify_forward.5} parent=5 // pred_fallthru
      _
    %p413 = scmp.le.s32.totalorder 1, %s21
    %p414 = scmp.lt.s32.totalorder %s21, 3
    %p415 = pnand %p413, %p414
    %p416 = pneg %p415
    // Predicated region
    $region69: #{vit_classify_forward.5} parent=5 // pred_check
      _
    $region70: #{vit_classify_forward.5} parent=5 // pred_check_branch
      %418 = sbr.rel (%p415) target = $region72
    $region71: #{vit_classify_forward.5} parent=5 // pred_region
      %s419 = ssub.s32 %s21, 1
      %p420 = scmp.lt.s32.totalorder %s26, 1
      %s421 = scalar_select %p420, %s26, 1
      %s422 = smul.addr %s421, 8
      %s423 = scalar_lea.vmem %s0, %s422
      %p424 = pneg %p47
      %p425 = pneg %p44
      %p426 = pneg %p68
      %p427 = pneg %p65
      %p428 = pneg %p89
      %p429 = pneg %p86
      %p430 = pneg %p110
      %p431 = pneg %p107
      %p432 = pneg %p131
      %p433 = pneg %p128
      %p434 = pneg %p152
      %p435 = pneg %p149
      %p436 = pneg %p173
      %p437 = pneg %p170
      %p438 = pneg %p194
      %p439 = pneg %p191
      %p440 = pneg %p215
      %p441 = pneg %p212
      %p442 = pneg %p236
      %p443 = pneg %p233
      %p444 = pneg %p257
      %p445 = pneg %p254
      %p446 = pneg %p278
      %p447 = pneg %p275
      %p448 = pneg %p299
      %p449 = pneg %p296
      %p450 = pneg %p325
      %p451 = pneg %p322
      %p452 = scmp.lt.s32.totalorder %s26, 1
      %s453 = scalar_select %p452, %s26, 1
      %s454 = smul.addr %s453, 8
      %s455 = scalar_lea.vmem %s13, %s454
      %p456 = pneg %p351
      %p457 = pneg %p348
      %p458 = scmp.lt.s32.totalorder %s26, 1
      %s459 = scalar_select %p458, %s26, 1
      %s460 = smul.addr %s459, 4
      %s461 = smul.addr %s460, 8
      %s462 = scalar_lea.vmem %s14, %s461
      %p463 = scmp.lt.s32.totalorder %s26, 1
      %s464 = scalar_select %p463, %s26, 1
      %s465 = smul.addr %s464, 8
      %s466 = scalar_lea.vmem %s0, %s465
      %p467 = scmp.lt.s32.totalorder %s26, 1
      %s468 = scalar_select %p467, %s26, 1
      %s469 = smul.addr %s468, 8
      %s470 = scalar_lea.vmem %s13, %s469
      %p471 = scmp.lt.s32.totalorder %s26, 1
      %s472 = scalar_select %p471, %s26, 1
      %s473 = smul.addr %s472, 4
      %s474 = smul.addr %s473, 8
      %s475 = scalar_lea.vmem %s14, %s474
      %v477 = vld [vmem:[%s466] sm:$0x1f]
      %v478 = vld [vmem:[%s1] sm:$0x1]
      %v479 = vld [vmem:[%s2] sm:$0x1]
      %vm480 = vcmask 258048
      %v481 = vsel %vm480, %v477, 0.0
      %482 = vadd.xlane.f32.xlu0 %v481
      %v483 = vpop.xlane.xlu0 %482
      %v484 = vrcp.pop 32.0
      %v485 = vmul.f32 32.0, %v484
      %v486 = vsub.f32 1.0, %v485
      %v487 = vmul.f32 %v484, %v486
      %v488 = vadd.f32 %v484, %v487
      %vm489 = vweird.f32 %v484
      %v490 = vsel %vm489, %v484, %v488
      %v491 = vmul.f32 %v483, %v490
      %v492 = vsub.f32 %v477, %v491
      %v493 = vmul.f32 %v492, %v492
      %v494 = vsel %vm480, %v493, 0.0
      %495 = vadd.xlane.f32.xlu0 %v494
      %v496 = vpop.xlane.xlu0 %495
      %v497 = vmul.f32 %v496, %v490
      %v498 = vadd.f32 %v497, 1e-12
      %v499 = vrsqrt.pop %v498
      %v500 = vmul.f32 %v499, %v498
      %v501 = vmul.f32 %v500, %v499
      %v502 = vmul.f32 0.5, %v501
      %v503 = vsub.f32 1.5, %v502
      %v504 = vmul.f32 %v499, %v503
      %vm505 = vweird.f32 %v498
      %vm506 = vweird.f32 %v499
      %vm507 = vmor %vm505, %vm506
      %v508 = vsel %vm507, %v499, %v504
      %v509 = vmul.f32 %v492, %v508
      %v511 = vperm.slane %v478, 0
      %v513 = vmul.f32 %v509, %v511
      %v515 = vperm.slane %v479, 0
      %v517 = vadd.f32 %v513, %v515
      %v518 = vpack.c.bf16 %v517, %v517
      %v519 = vld [vmem:[%s3] sm:$0xf]
      %v520 = vld [vmem:[%s3 + $0x4] sm:$0xf]
      %v521 = vld [vmem:[%s3 + $0x8] sm:$0xf]
      %v522 = vld [vmem:[%s3 + $0xc] sm:$0xf]
      %v523 = vld [vmem:[%s4] sm:$0x1]
      %v525 = vperm.slane %v523, 0
      %v531 = vunpack.c.l.b16 %v519
      %v532 = vunpack.c.l.b16 %v520
      %v533 = vunpack.c.l.b16 %v521
      %v534 = vunpack.c.l.b16 %v522
      %v535 = vpack.c.b16 %v532, %v531
      %v536 = vpack.c.b16 %v534, %v533
      %vm539 = vcmask 261120
      %v541 = vsel %vm539, %v518, 0
      %543 = vmatpush.bf16.msra.mxu0 0
      %544 = vmatpush.bf16.msra.mxu0 0
      %545 = vmatpush.bf16.msra.mxu0 0
      %546 = vmatpush.bf16.msra.mxu0 0
      %547 = vmatpush.bf16.msra.mxu0 0
      %548 = vmatpush.bf16.msra.mxu0 0
      %549 = vmatpush.bf16.msra.mxu0 %v536
      %550 = vmatpush.bf16.msra.mxu0 %v535
      %551 = vmatmul.bf16.gmra.mxu0 %v541
      %v552 = vpop.f32.mrf.mxu0
      %v553 = vadd.f32 %v525, %v552
      %v554 = vpop.f32.mrf.mxu0
      %555 = vdwg.mxu0
      %v556 = vmul.f32 %v553, 0.35355338
      %v557 = vpack.c.bf16 %v556, %v556
      %v558 = vpack.c.bf16 %v553, %v553
      %v560 = vunpack.c.l.b16 %v558
      %v561 = vpack.c.b16 %v560, %v560
      %562 = vrot.lane.b32.xlu0 %v561, 96
      %v563 = vpop.permute.xlu0 %562
      %vm564 = vcmask 64512
      %v566 = vsel %vm564, %v557, 0
      %v569 = vsel %vm564, %v563, 0
      %571 = vmatpush.bf16.xpose.msra.mxu0 0
      %572 = vmatpush.bf16.xpose.msra.mxu0 0
      %573 = vmatpush.bf16.xpose.msra.mxu0 0
      %574 = vmatpush.bf16.xpose.msra.mxu0 0
      %575 = vmatpush.bf16.xpose.msra.mxu0 0
      %576 = vmatpush.bf16.xpose.msra.mxu0 0
      %577 = vmatpush.bf16.xpose.msra.mxu0 0
      %578 = vmatpush.bf16.xpose.msra.mxu0 %v569
      %579 = vmatmul.bf16.gmra.mxu0 %v566
      %v580 = vpop.f32.mrf.mxu0
      %v581 = vadd.f32 0.0, %v580
      %v582 = vpop.f32.mrf.mxu0
      %583 = vdwg.mxu0
      %vm584 = vcmask 36864
      %v585 = vsel %vm584, %v581, -inf
      %586 = vmax.xlane.f32.xlu0 %v585
      %v587 = vpop.xlane.xlu0 %586
      %v588 = vsub.f32 %v581, %v587
      %v589 = vmul.f32 %v588, 1.442695
      %v590 = vpow.pop %v589
      %v591 = vsel %vm584, %v590, 0.0
      %592 = vadd.xlane.f32.xlu0 %v591
      %v593 = vpop.xlane.xlu0 %592
      %v594 = vrcp.pop %v593
      %v595 = vmul.f32 %v590, %v594
      %596 = vst.msk [vmem:[%s475] sm:$0x1f] %vm584, %v595
      %v597 = vpack.c.bf16 %v595, %v595
      %598 = vrot.lane.b32.xlu0 %v561, 64
      %v599 = vpop.permute.xlu0 %598
      %vm600 = vcmask 39936
      %v602 = vsel %vm600, %v597, 0
      %vm604 = vcmask 1041408
      %vm605 = vcmask 1042432
      %v606 = vsel %vm604, 4294967295, 65535
      %v607 = vsel %vm605, %v606, 0
      %v609 = vand.u32 %v599, %v607
      %611 = vmatpush.bf16.msra.mxu0 0
      %612 = vmatpush.bf16.msra.mxu0 0
      %613 = vmatpush.bf16.msra.mxu0 0
      %614 = vmatpush.bf16.msra.mxu0 0
      %615 = vmatpush.bf16.msra.mxu0 0
      %616 = vmatpush.bf16.msra.mxu0 0
      %617 = vmatpush.bf16.msra.mxu0 0
      %618 = vmatpush.bf16.msra.mxu0 %v609
      %619 = vmatmul.bf16.gmra.mxu0 %v602
      %v620 = vpop.f32.mrf.mxu0
      %v621 = vadd.f32 0.0, %v620
      %v622 = vpop.f32.mrf.mxu0
      %623 = vdwg.mxu0
      %v625 = vunpack.c.l.b16 %v557
      %v626 = vpack.c.b16 %v625, %v625
      %627 = vrot.lane.b32.xlu0 %v626, 120
      %v628 = vpop.permute.xlu0 %627
      %629 = vrot.lane.b32.xlu0 %v561, 88
      %v630 = vpop.permute.xlu0 %629
      %v632 = vsel %vm564, %v628, 0
      %v635 = vsel %vm564, %v630, 0
      %637 = vmatpush.bf16.xpose.msra.mxu0 0
      %638 = vmatpush.bf16.xpose.msra.mxu0 0
      %639 = vmatpush.bf16.xpose.msra.mxu0 0
      %640 = vmatpush.bf16.xpose.msra.mxu0 0
      %641 = vmatpush.bf16.xpose.msra.mxu0 0
      %642 = vmatpush.bf16.xpose.msra.mxu0 0
      %643 = vmatpush.bf16.xpose.msra.mxu0 0
      %644 = vmatpush.bf16.xpose.msra.mxu0 %v635
      %645 = vmatmul.bf16.gmra.mxu0 %v632
      %v646 = vpop.f32.mrf.mxu0
      %v647 = vadd.f32 0.0, %v646
      %v648 = vpop.f32.mrf.mxu0
      %649 = vdwg.mxu0
      %v650 = vsel %vm584, %v647, -inf
      %651 = vmax.xlane.f32.xlu0 %v650
      %v652 = vpop.xlane.xlu0 %651
      %v653 = vsub.f32 %v647, %v652
      %v654 = vmul.f32 %v653, 1.442695
      %v655 = vpow.pop %v654
      %v656 = vsel %vm584, %v655, 0.0
      %657 = vadd.xlane.f32.xlu0 %v656
      %v658 = vpop.xlane.xlu0 %657
      %v659 = vrcp.pop %v658
      %v660 = vmul.f32 %v655, %v659
      %s661 = scalar_lea.vmem %s475, 8
      %662 = vst.msk [vmem:[%s661] sm:$0x1f] %vm584, %v660
      %v663 = vpack.c.bf16 %v660, %v660
      %664 = vrot.lane.b32.xlu0 %v561, 56
      %v665 = vpop.permute.xlu0 %664
      %v667 = vsel %vm600, %v663, 0
      %v670 = vand.u32 %v665, %v607
      %672 = vmatpush.bf16.msra.mxu0 0
      %673 = vmatpush.bf16.msra.mxu0 0
      %674 = vmatpush.bf16.msra.mxu0 0
      %675 = vmatpush.bf16.msra.mxu0 0
      %676 = vmatpush.bf16.msra.mxu0 0
      %677 = vmatpush.bf16.msra.mxu0 0
      %678 = vmatpush.bf16.msra.mxu0 0
      %679 = vmatpush.bf16.msra.mxu0 %v670
      %680 = vmatmul.bf16.gmra.mxu0 %v667
      %v681 = vpop.f32.mrf.mxu0
      %v682 = vadd.f32 0.0, %v681
      %v683 = vpop.f32.mrf.mxu0
      %684 = vdwg.mxu0
      %685 = vrot.lane.b32.xlu0 %v626, 112
      %v686 = vpop.permute.xlu0 %685
      %687 = vrot.lane.b32.xlu0 %v561, 80
      %v688 = vpop.permute.xlu0 %687
      %v690 = vsel %vm564, %v686, 0
      %v693 = vsel %vm564, %v688, 0
      %695 = vmatpush.bf16.xpose.msra.mxu0 0
      %696 = vmatpush.bf16.xpose.msra.mxu0 0
      %697 = vmatpush.bf16.xpose.msra.mxu0 0
      %698 = vmatpush.bf16.xpose.msra.mxu0 0
      %699 = vmatpush.bf16.xpose.msra.mxu0 0
      %700 = vmatpush.bf16.xpose.msra.mxu0 0
      %701 = vmatpush.bf16.xpose.msra.mxu0 0
      %702 = vmatpush.bf16.xpose.msra.mxu0 %v693
      %703 = vmatmul.bf16.gmra.mxu0 %v690
      %v704 = vpop.f32.mrf.mxu0
      %v705 = vadd.f32 0.0, %v704
      %v706 = vpop.f32.mrf.mxu0
      %707 = vdwg.mxu0
      %v708 = vsel %vm584, %v705, -inf
      %709 = vmax.xlane.f32.xlu0 %v708
      %v710 = vpop.xlane.xlu0 %709
      %v711 = vsub.f32 %v705, %v710
      %v712 = vmul.f32 %v711, 1.442695
      %v713 = vpow.pop %v712
      %v714 = vsel %vm584, %v713, 0.0
      %715 = vadd.xlane.f32.xlu0 %v714
      %v716 = vpop.xlane.xlu0 %715
      %v717 = vrcp.pop %v716
      %v718 = vmul.f32 %v713, %v717
      %s719 = scalar_lea.vmem %s475, 16
      %720 = vst.msk [vmem:[%s719] sm:$0x1f] %vm584, %v718
      %v721 = vpack.c.bf16 %v718, %v718
      %722 = vrot.lane.b32.xlu0 %v561, 48
      %v723 = vpop.permute.xlu0 %722
      %v725 = vsel %vm600, %v721, 0
      %v728 = vand.u32 %v723, %v607
      %730 = vmatpush.bf16.msra.mxu0 0
      %731 = vmatpush.bf16.msra.mxu0 0
      %732 = vmatpush.bf16.msra.mxu0 0
      %733 = vmatpush.bf16.msra.mxu0 0
      %734 = vmatpush.bf16.msra.mxu0 0
      %735 = vmatpush.bf16.msra.mxu0 0
      %736 = vmatpush.bf16.msra.mxu0 0
      %737 = vmatpush.bf16.msra.mxu0 %v728
      %738 = vmatmul.bf16.gmra.mxu0 %v725
      %v739 = vpop.f32.mrf.mxu0
      %v740 = vadd.f32 0.0, %v739
      %v741 = vpop.f32.mrf.mxu0
      %742 = vdwg.mxu0
      %743 = vrot.lane.b32.xlu0 %v626, 104
      %v744 = vpop.permute.xlu0 %743
      %745 = vrot.lane.b32.xlu0 %v561, 72
      %v746 = vpop.permute.xlu0 %745
      %v748 = vsel %vm564, %v744, 0
      %v751 = vsel %vm564, %v746, 0
      %753 = vmatpush.bf16.xpose.msra.mxu0 0
      %754 = vmatpush.bf16.xpose.msra.mxu0 0
      %755 = vmatpush.bf16.xpose.msra.mxu0 0
      %756 = vmatpush.bf16.xpose.msra.mxu0 0
      %757 = vmatpush.bf16.xpose.msra.mxu0 0
      %758 = vmatpush.bf16.xpose.msra.mxu0 0
      %759 = vmatpush.bf16.xpose.msra.mxu0 0
      %760 = vmatpush.bf16.xpose.msra.mxu0 %v751
      %761 = vmatmul.bf16.gmra.mxu0 %v748
      %v762 = vpop.f32.mrf.mxu0
      %v763 = vadd.f32 0.0, %v762
      %v764 = vpop.f32.mrf.mxu0
      %765 = vdwg.mxu0
      %v766 = vsel %vm584, %v763, -inf
      %767 = vmax.xlane.f32.xlu0 %v766
      %v768 = vpop.xlane.xlu0 %767
      %v769 = vsub.f32 %v763, %v768
      %v770 = vmul.f32 %v769, 1.442695
      %v771 = vpow.pop %v770
      %v772 = vsel %vm584, %v771, 0.0
      %773 = vadd.xlane.f32.xlu0 %v772
      %v774 = vpop.xlane.xlu0 %773
      %v775 = vrcp.pop %v774
      %v776 = vmul.f32 %v771, %v775
      %s777 = scalar_lea.vmem %s475, 24
      %778 = vst.msk [vmem:[%s777] sm:$0x1f] %vm584, %v776
      %v779 = vpack.c.bf16 %v776, %v776
      %780 = vrot.lane.b32.xlu0 %v561, 40
      %v781 = vpop.permute.xlu0 %780
      %v783 = vsel %vm600, %v779, 0
      %v786 = vand.u32 %v781, %v607
      %788 = vmatpush.bf16.msra.mxu0 0
      %789 = vmatpush.bf16.msra.mxu0 0
      %790 = vmatpush.bf16.msra.mxu0 0
      %791 = vmatpush.bf16.msra.mxu0 0
      %792 = vmatpush.bf16.msra.mxu0 0
      %793 = vmatpush.bf16.msra.mxu0 0
      %794 = vmatpush.bf16.msra.mxu0 0
      %795 = vmatpush.bf16.msra.mxu0 %v786
      %796 = vmatmul.bf16.gmra.mxu0 %v783
      %v797 = vpop.f32.mrf.mxu0
      %v798 = vadd.f32 0.0, %v797
      %v799 = vpop.f32.mrf.mxu0
      %800 = vdwg.mxu0
      %802 = vrot.lane.b32.xlu0 %v682, 8
      %v803 = vpop.permute.xlu0 %802
      %806 = vrot.lane.b32.xlu0 %v740, 16
      %v807 = vpop.permute.xlu0 %806
      %810 = vrot.lane.b32.xlu0 %v798, 24
      %v811 = vpop.permute.xlu0 %810
      %v813 = vsel %vm564, %v621, %v803
      %vm814 = vcmask 130048
      %v815 = vsel %vm814, %v813, %v807
      %vm816 = vcmask 195584
      %v817 = vsel %vm816, %v815, %v811
      %v818 = vpack.c.bf16 %v817, %v817
      %v819 = vld [vmem:[%s5] sm:$0xf]
      %v820 = vld [vmem:[%s5 + $0x4] sm:$0xf]
      %v821 = vld [vmem:[%s5 + $0x8] sm:$0xf]
      %v822 = vld [vmem:[%s5 + $0xc] sm:$0xf]
      %v823 = vld [vmem:[%s6] sm:$0x1]
      %v825 = vperm.slane %v823, 0
      %v831 = vunpack.c.l.b16 %v819
      %v832 = vunpack.c.l.b16 %v820
      %v833 = vunpack.c.l.b16 %v821
      %v834 = vunpack.c.l.b16 %v822
      %v835 = vpack.c.b16 %v832, %v831
      %v836 = vpack.c.b16 %v834, %v833
      %v840 = vsel %vm539, %v818, 0
      %842 = vmatpush.bf16.msra.mxu0 0
      %843 = vmatpush.bf16.msra.mxu0 0
      %844 = vmatpush.bf16.msra.mxu0 0
      %845 = vmatpush.bf16.msra.mxu0 0
      %846 = vmatpush.bf16.msra.mxu0 0
      %847 = vmatpush.bf16.msra.mxu0 0
      %848 = vmatpush.bf16.msra.mxu0 %v836
      %849 = vmatpush.bf16.msra.mxu0 %v835
      %850 = vmatmul.bf16.gmra.mxu0 %v840
      %v851 = vpop.f32.mrf.mxu0
      %v852 = vadd.f32 %v825, %v851
      %v853 = vpop.f32.mrf.mxu0
      %854 = vdwg.mxu0
      %v855 = vadd.f32 %v477, %v852
      %v856 = vld [vmem:[%s7] sm:$0x1]
      %v857 = vld [vmem:[%s8] sm:$0x1]
      %v858 = vsel %vm480, %v855, 0.0
      %859 = vadd.xlane.f32.xlu0 %v858
      %v860 = vpop.xlane.xlu0 %859
      %v861 = vmul.f32 %v860, %v490
      %v862 = vsub.f32 %v855, %v861
      %v863 = vmul.f32 %v862, %v862
      %v864 = vsel %vm480, %v863, 0.0
      %865 = vadd.xlane.f32.xlu0 %v864
      %v866 = vpop.xlane.xlu0 %865
      %v867 = vmul.f32 %v866, %v490
      %v868 = vadd.f32 %v867, 1e-12
      %v869 = vrsqrt.pop %v868
      %v870 = vmul.f32 %v869, %v868
      %v871 = vmul.f32 %v870, %v869
      %v872 = vmul.f32 0.5, %v871
      %v873 = vsub.f32 1.5, %v872
      %v874 = vmul.f32 %v869, %v873
      %vm875 = vweird.f32 %v868
      %vm876 = vweird.f32 %v869
      %vm877 = vmor %vm875, %vm876
      %v878 = vsel %vm877, %v869, %v874
      %v879 = vmul.f32 %v862, %v878
      %v881 = vperm.slane %v856, 0
      %v883 = vmul.f32 %v879, %v881
      %v885 = vperm.slane %v857, 0
      %v887 = vadd.f32 %v883, %v885
      %v888 = vpack.c.bf16 %v887, %v887
      %v889 = vld [vmem:[%s9] sm:$0xf]
      %v890 = vld [vmem:[%s9 + $0x4] sm:$0xf]
      %v891 = vld [vmem:[%s9 + $0x8] sm:$0xf]
      %v892 = vld [vmem:[%s9 + $0xc] sm:$0xf]
      %v893 = vld [vmem:[%s10] sm:$0x1]
      %v895 = vperm.slane %v893, 0
      %v901 = vunpack.c.l.b16 %v889
      %v902 = vunpack.c.l.b16 %v890
      %v903 = vunpack.c.l.b16 %v891
      %v904 = vunpack.c.l.b16 %v892
      %v905 = vpack.c.b16 %v902, %v901
      %v906 = vpack.c.b16 %v904, %v903
      %v910 = vsel %vm539, %v888, 0
      %912 = vmatpush.bf16.msra.mxu0 0
      %913 = vmatpush.bf16.msra.mxu0 0
      %914 = vmatpush.bf16.msra.mxu0 0
      %915 = vmatpush.bf16.msra.mxu0 0
      %916 = vmatpush.bf16.msra.mxu0 0
      %917 = vmatpush.bf16.msra.mxu0 0
      %918 = vmatpush.bf16.msra.mxu0 %v906
      %919 = vmatpush.bf16.msra.mxu0 %v905
      %920 = vmatmul.bf16.gmra.mxu0 %v910
      %v921 = vpop.f32.mrf.mxu0
      %v922 = vadd.f32 %v895, %v921
      %v923 = vpop.f32.mrf.mxu0
      %924 = vdwg.mxu0
      %v925 = vmul.f32 %v922, 0.5
      %v926 = vmul.f32 %v922, 0.044715
      %v927 = vmul.f32 %v926, %v922
      %v928 = vmul.f32 %v927, %v922
      %v929 = vadd.f32 %v922, %v928
      %v930 = vmul.f32 %v929, 0.7978846
      %v931 = vtanh.pop %v930
      %v932 = vadd.f32 %v931, 1.0
      %v933 = vmul.f32 %v925, %v932
      %v934 = vpack.c.bf16 %v933, %v933
      %v935 = vld [vmem:[%s11] sm:$0xf]
      %v936 = vld [vmem:[%s11 + $0x4] sm:$0xf]
      %v937 = vld [vmem:[%s11 + $0x8] sm:$0xf]
      %v938 = vld [vmem:[%s11 + $0xc] sm:$0xf]
      %v939 = vld [vmem:[%s11 + $0x10] sm:$0xf]
      %v940 = vld [vmem:[%s11 + $0x14] sm:$0xf]
      %v941 = vld [vmem:[%s11 + $0x18] sm:$0xf]
      %v942 = vld [vmem:[%s11 + $0x1c] sm:$0xf]
      %v943 = vld [vmem:[%s12] sm:$0x1]
      %v945 = vperm.slane %v943, 0
      %v955 = vunpack.c.l.b16 %v935
      %v956 = vunpack.c.l.b16 %v936
      %v957 = vunpack.c.l.b16 %v937
      %v958 = vunpack.c.l.b16 %v938
      %v959 = vunpack.c.l.b16 %v939
      %v960 = vunpack.c.l.b16 %v940
      %v961 = vunpack.c.l.b16 %v941
      %v962 = vunpack.c.l.b16 %v942
      %v963 = vpack.c.b16 %v956, %v955
      %v964 = vpack.c.b16 %v958, %v957
      %v965 = vpack.c.b16 %v960, %v959
      %v966 = vpack.c.b16 %v962, %v961
      %vm971 = vcmask 523264
      %v973 = vsel %vm971, %v934, 0
      %975 = vmatpush.bf16.msra.mxu0 0
      %976 = vmatpush.bf16.msra.mxu0 0
      %977 = vmatpush.bf16.msra.mxu0 0
      %978 = vmatpush.bf16.msra.mxu0 0
      %979 = vmatpush.bf16.msra.mxu0 %v966
      %980 = vmatpush.bf16.msra.mxu0 %v965
      %981 = vmatpush.bf16.msra.mxu0 %v964
      %982 = vmatpush.bf16.msra.mxu0 %v963
      %983 = vmatmul.bf16.gmra.mxu0 %v973
      %v984 = vpop.f32.mrf.mxu0
      %v985 = vadd.f32 %v945, %v984
      %v986 = vpop.f32.mrf.mxu0
      %987 = vdwg.mxu0
      %v988 = vadd.f32 %v855, %v985
      %989 = vst.msk [vmem:[%s470] sm:$0x1f] %vm480, %v988
      %p990 = scmp.lt.s32.totalorder %s26, 1
      %s991 = scalar_select %p990, %s26, 1
      %s992 = smul.addr %s991, 8
      %s993 = scalar_lea.vmem %s13, %s992
      %p994 = scmp.lt.s32.totalorder %s26, 1
      %s995 = scalar_select %p994, %s26, 1
      %s996 = smul.addr %s995, 4
      %s997 = smul.addr %s996, 8
      %s998 = scalar_lea.vmem %s14, %s997
      // Predicated region
      $region73: #{vit_classify_forward.5} parent=71 // pred_check
        %p999 = pneg %p322
      $region74: #{vit_classify_forward.5} parent=71 // pred_check_branch
        %1001 = sbr.rel (%p999) target = $region76
      $region75: #{vit_classify_forward.5} parent=71 // pred_region
        _
      $region76: #{vit_classify_forward.5} parent=71 // pred_fallthru
        _
      // Predicated region
      $region77: #{vit_classify_forward.5} parent=71 // pred_check
        %p1002 = pneg %p348
      $region78: #{vit_classify_forward.5} parent=71 // pred_check_branch
        %1004 = sbr.rel (%p1002) target = $region80
      $region79: #{vit_classify_forward.5} parent=71 // pred_region
        _
      $region80: #{vit_classify_forward.5} parent=71 // pred_fallthru
        _
    $region72: #{vit_classify_forward.5} parent=5 // pred_fallthru
      _
    %p1005 = scmp.le.s32.totalorder 2, %s21
    // Predicated region
    $region81: #{vit_classify_forward.5} parent=5 // pred_check
      %p1006 = pneg %p1005
    $region82: #{vit_classify_forward.5} parent=5 // pred_check_branch
      %1008 = sbr.rel (%p1006) target = $region84
    $region83: #{vit_classify_forward.5} parent=5 // pred_region
      %s1009 = ssub.s32 %s21, 2
      // Predicated region
      $region85: #{vit_classify_forward.5} parent=83 // pred_check
        %p1010 = pneg %p328
      $region86: #{vit_classify_forward.5} parent=83 // pred_check_branch
        %1012 = sbr.rel (%p1010) target = $region88
      $region87: #{vit_classify_forward.5} parent=83 // pred_region
        %p1013 = scmp.lt.s32.totalorder %s27, 1
        %s1014 = scalar_select %p1013, %s27, 1
        %s1015 = smul.addr %s1014, 8
        %s1016 = scalar_lea.vmem %s13, %s1015
      $region88: #{vit_classify_forward.5} parent=83 // pred_fallthru
        _
      // Predicated region
      $region89: #{vit_classify_forward.5} parent=83 // pred_check
        %p1017 = pneg %p354
      $region90: #{vit_classify_forward.5} parent=83 // pred_check_branch
        %1019 = sbr.rel (%p1017) target = $region92
      $region91: #{vit_classify_forward.5} parent=83 // pred_region
        %p1020 = scmp.lt.s32.totalorder %s27, 1
        %s1021 = scalar_select %p1020, %s27, 1
        %s1022 = smul.addr %s1021, 4
        %s1023 = smul.addr %s1022, 8
        %s1024 = scalar_lea.vmem %s14, %s1023
      $region92: #{vit_classify_forward.5} parent=83 // pred_fallthru
        _
    $region84: #{vit_classify_forward.5} parent=5 // pred_fallthru
      _
  $region6: #{vit_classify_forward.5} parent=0 // loop_footer
    %s25 = sadd.s32 1, %s21
  $region7: #{vit_classify_forward.5} parent=0 // loop_footer_branch
    %20 = sbr.rel target = $region3
  $region8: #{vit_classify_forward.5} parent=0 // loop_exit
    _

</llo_original>
